<compile_context>
chip_gen: v6e
topology: v6e:2x2x1
jax: 0.10.0
libtpu: 0.0.40
codegen_flags: <defaults>
</compile_context>

<pallas_src>
import functools

import jax
import jax.numpy as jnp
from jax import lax
from jax.experimental import pallas as pl
from jax.experimental.pallas import tpu as pltpu

EPS = 1e-5


# --------------------------------------------------------------------------------------
# small static helpers (host-side tiling decisions)
# --------------------------------------------------------------------------------------
def _divisors(n):
    return [d for d in range(1, n + 1) if n % d == 0]


def _pick_rows(ho, wo, cout, cap_bytes=2 << 20):
    """Largest divisor of Ho whose f32 output tile stays under cap_bytes."""
    best = 1
    for th in _divisors(ho):
        if th * wo * cout * 4 <= cap_bytes:
            best = th
    return best


def _row_tile(m, cap_rows=2048):
    """Largest divisor of m that is a multiple of 16 (bf16 sublane) and <= cap."""
    cands = [t for t in _divisors(m) if t % 16 == 0 and t <= cap_rows]
    return max(cands) if cands else m


def _w_taps(w_oihw):
    """(Cout, Cin, kh, kw) -> (kh*kw, Cin, Cout) bf16 tap matrices."""
    cout, cin, kh, kw = w_oihw.shape
    return (jnp.transpose(w_oihw, (2, 3, 1, 0))
            .reshape(kh * kw, cin, cout)
            .astype(jnp.bfloat16))


def _space_to_depth_conv1(x, w_oihw):
    """Rewrite a 3x3 / stride-2 / pad-1 conv as a 2x2 / stride-1 conv over a
    space-to-depth (2x2 spatial -> channel) transform of the padded input."""
    n, h, w, cin = x.shape
    cout = w_oihw.shape[0]
    ho, wo = (h - 1) // 2 + 1, (w - 1) // 2 + 1
    ph, pw = 2 * (ho + 1) - h, 2 * (wo + 1) - w      # total pad (>= 2), 1 on top/left
    xp = jnp.pad(x, ((0, 0), (1, ph - 1), (1, pw - 1), (0, 0)))
    s2d = (xp.reshape(n, ho + 1, 2, wo + 1, 2, cin)
             .transpose(0, 1, 3, 2, 4, 5)
             .reshape(n, ho + 1, wo + 1, 4 * cin))
    wt = jnp.transpose(w_oihw, (2, 3, 1, 0))          # (3, 3, Cin, Cout)
    w2 = jnp.zeros((2, 2, 2, 2, cin, cout), jnp.float32)
    for dy in range(2):
        for dx in range(2):
            for a in range(2):
                for b in range(2):
                    ky, kx = 2 * dy + a, 2 * dx + b
                    if ky < 3 and kx < 3:
                        w2 = w2.at[dy, dx, a, b].set(wt[ky, kx])
    w2 = w2.reshape(4, 4 * cin, cout)                 # tap = dy*2+dx, K = 4*Cin
    return s2d.astype(jnp.bfloat16), w2.astype(jnp.bfloat16)


# --------------------------------------------------------------------------------------
# kernel 1: direct conv (stride 1, pre-padded NHWC input) + fused BN batch statistics
# --------------------------------------------------------------------------------------
def _conv_bn_kernel(x_ref, w_ref, gamma_ref, beta_ref,
                    y_ref, scale_ref, shift_ref,
                    sum_sc, sq_sc, *, kh, kw, n_rows):
    th, wo, cout = y_ref.shape[1], y_ref.shape[2], y_ref.shape[3]
    step = pl.program_id(0) * pl.num_programs(1) + pl.program_id(1)
    n_steps = pl.num_programs(0) * pl.num_programs(1)
    row0 = pl.program_id(1) * th

    @pl.when(step == 0)
    def _():
        sum_sc[...] = jnp.zeros_like(sum_sc)
        sq_sc[...] = jnp.zeros_like(sq_sc)

    def body(i, carry):
        acc = jnp.zeros((wo, cout), jnp.float32)
        for ky in range(kh):                          # static unroll (<= 3)
            row = x_ref[0, row0 + i + ky]             # (Wp, Cin), bf16
            for kx in range(kw):                      # static unroll (<= 3)
                acc += jnp.dot(row[kx:kx + wo, :], w_ref[ky * kw + kx],
                               preferred_element_type=jnp.float32)
        # fused BatchNorm (training-mode) statistics accumulation
        sum_sc[...] += jnp.sum(acc, axis=0, keepdims=True)
        sq_sc[...] += jnp.sum(acc * acc, axis=0, keepdims=True)
        y_ref[0, i] = acc
        return carry

    lax.fori_loop(0, th, body, 0)

    @pl.when(step == n_steps - 1)
    def _():
        mean = sum_sc[...] / n_rows
        var = sq_sc[...] / n_rows - mean * mean       # biased var (PyTorch BN forward)
        scale = gamma_ref[...] * lax.rsqrt(var + EPS)
        scale_ref[...] = scale
        shift_ref[...] = beta_ref[...] - mean * scale


def conv_bn(x_pad, w_taps, gamma, beta, *, kh, kw, ho, wo):
    """Direct stride-1 conv over a pre-padded bf16 NHWC input + fused BN stats.

    Returns (y_f32[N,Ho,Wo,Cout], scale[1,Cout], shift[1,Cout])."""
    n, hp, wp, cin = x_pad.shape
    taps, _, cout = w_taps.shape
    assert taps == kh * kw and hp == ho + kh - 1 and wp == wo + kw - 1
    th = _pick_rows(ho, wo, cout)
    kern = functools.partial(_conv_bn_kernel, kh=kh, kw=kw, n_rows=float(n * ho * wo))
    vec = pl.BlockSpec((1, cout), lambda b, r: (0, 0))
    y, scale, shift = pl.pallas_call(
        kern,
        out_shape=(jax.ShapeDtypeStruct((n, ho, wo, cout), jnp.float32),
                   jax.ShapeDtypeStruct((1, cout), jnp.float32),
                   jax.ShapeDtypeStruct((1, cout), jnp.float32)),
        grid_spec=pltpu.PrefetchScalarGridSpec(
            num_scalar_prefetch=0,
            grid=(n, ho // th),
            in_specs=[pl.BlockSpec((1, hp, wp, cin), lambda b, r: (b, 0, 0, 0)),
                      pl.BlockSpec((taps, cin, cout), lambda b, r: (0, 0, 0)),
                      vec, vec],
            out_specs=(pl.BlockSpec((1, th, wo, cout), lambda b, r: (b, r, 0, 0)),
                       vec, vec),
            scratch_shapes=[pltpu.VMEM((1, cout), jnp.float32),
                            pltpu.VMEM((1, cout), jnp.float32)]),
        # both axes "arbitrary": the BN statistics accumulate sequentially across the
        # whole grid (batch + row tiles) in the shared scratch.
        compiler_params=pltpu.CompilerParams(
            dimension_semantics=("arbitrary", "arbitrary")),
    )(x_pad, w_taps,
      gamma.reshape(1, cout).astype(jnp.float32),
      beta.reshape(1, cout).astype(jnp.float32))
    return y, scale, shift


# --------------------------------------------------------------------------------------
# kernel 2: fused BN apply (folded scale/shift) + ReLU
# --------------------------------------------------------------------------------------
def _bn_act_kernel(y_ref, s_ref, t_ref, o_ref):
    o_ref[...] = jnp.maximum(y_ref[...] * s_ref[...] + t_ref[...],
                             0.0).astype(o_ref.dtype)


def bn_act(y, scale, shift, out_dtype=jnp.float32):
    n, ho, wo, c = y.shape
    img = pl.BlockSpec((1, ho, wo, c), lambda b: (b, 0, 0, 0))
    vec = pl.BlockSpec((1, c), lambda b: (0, 0))
    return pl.pallas_call(
        _bn_act_kernel,
        out_shape=jax.ShapeDtypeStruct((n, ho, wo, c), out_dtype),
        grid_spec=pltpu.PrefetchScalarGridSpec(
            num_scalar_prefetch=0, grid=(n,),
            in_specs=[img, vec, vec], out_specs=img),
        compiler_params=pltpu.CompilerParams(dimension_semantics=("parallel",)),
    )(y, scale, shift)


# --------------------------------------------------------------------------------------
# kernel 3: fused BN apply + ReLU + residual add + final ReLU
# --------------------------------------------------------------------------------------
def _bn_act_add_kernel(y_ref, r_ref, s_ref, t_ref, o_ref):
    bn = jnp.maximum(y_ref[...] * s_ref[...] + t_ref[...], 0.0)
    o_ref[...] = jnp.maximum(bn + r_ref[...], 0.0)


def bn_act_add(y, resid, scale, shift):
    n, ho, wo, c = y.shape
    img = pl.BlockSpec((1, ho, wo, c), lambda b: (b, 0, 0, 0))
    vec = pl.BlockSpec((1, c), lambda b: (0, 0))
    return pl.pallas_call(
        _bn_act_add_kernel,
        out_shape=jax.ShapeDtypeStruct((n, ho, wo, c), jnp.float32),
        grid_spec=pltpu.PrefetchScalarGridSpec(
            num_scalar_prefetch=0, grid=(n,),
            in_specs=[img, img, vec, vec], out_specs=img),
        compiler_params=pltpu.CompilerParams(dimension_semantics=("parallel",)),
    )(y, resid, scale, shift)


# --------------------------------------------------------------------------------------
# kernel 4: GEMM + bias (1x1 stride-2 projection on the residual path)
# --------------------------------------------------------------------------------------
def _matmul_bias_kernel(a_ref, w_ref, b_ref, o_ref):
    o_ref[...] = (jnp.dot(a_ref[...], w_ref[...],
                          preferred_element_type=jnp.float32)
                  + b_ref[...]).astype(o_ref.dtype)


def matmul_bias(a, w, bias):
    m, kdim = a.shape
    _, nn = w.shape
    tm = _row_tile(m)
    return pl.pallas_call(
        _matmul_bias_kernel,
        out_shape=jax.ShapeDtypeStruct((m, nn), jnp.float32),
        grid_spec=pltpu.PrefetchScalarGridSpec(
            num_scalar_prefetch=0, grid=(m // tm,),
            in_specs=[pl.BlockSpec((tm, kdim), lambda i: (i, 0)),
                      pl.BlockSpec((kdim, nn), lambda i: (0, 0)),
                      pl.BlockSpec((1, nn), lambda i: (0, 0))],
            out_specs=pl.BlockSpec((tm, nn), lambda i: (i, 0))),
        compiler_params=pltpu.CompilerParams(dimension_semantics=("parallel",)),
    )(a, w, bias.reshape(1, nn).astype(jnp.float32))


# --------------------------------------------------------------------------------------
# full ResNet block forward
# --------------------------------------------------------------------------------------
def resnet_block_pallas(x_nchw, params, same_shape):
    x = jnp.transpose(x_nchw, (0, 2, 3, 1)).astype(jnp.float32)     # NCHW -> NHWC
    n, h, w, cin = x.shape
    cout = params["w1"].shape[0]

    # ---- conv1 (+ fused BN1 stats -> folded scale/shift) ----
    if same_shape:
        xp = jnp.pad(x, ((0, 0), (1, 1), (1, 1), (0, 0))).astype(jnp.bfloat16)
        w1 = _w_taps(params["w1"])                                   # (9, Cin, Cout)
        ho, wo = h, w
        y1, s1, t1 = conv_bn(xp, w1, params["g1"], params["b1"], kh=3, kw=3, ho=ho, wo=wo)
    else:
        xs2d, w1 = _space_to_depth_conv1(x, params["w1"])            # 2x2 conv, 4*Cin
        ho, wo = (h - 1) // 2 + 1, (w - 1) // 2 + 1
        y1, s1, t1 = conv_bn(xs2d, w1, params["g1"], params["b1"], kh=2, kw=2, ho=ho, wo=wo)

    h1 = bn_act(y1, s1, t1, out_dtype=jnp.bfloat16)                  # (N,Ho,Wo,Cout) bf16

    # ---- conv2 (stride 1) + fused BN2 stats ----
    h1p = jnp.pad(h1, ((0, 0), (1, 1), (1, 1), (0, 0)))
    w2 = _w_taps(params["w2"])
    y2, s2, t2 = conv_bn(h1p, w2, params["g2"], params["b2"], kh=3, kw=3, ho=ho, wo=wo)

    # ---- residual path ----
    if same_shape:
        resid = x                                                    # identity (Cin == Cout)
    else:
        xs = x[:, ::2, ::2, :]                                       # 1x1 / stride-2 projection
        a = xs.reshape(n * ho * wo, cin).astype(jnp.bfloat16)
        w3 = params["w3"].reshape(cout, cin).T.astype(jnp.bfloat16)
        resid = matmul_bias(a, w3, params["b3"]).reshape(n, ho, wo, cout)

    out = bn_act_add(y2, resid, s2, t2)                              # (N,Ho,Wo,Cout) f32
    return jnp.transpose(out, (0, 3, 1, 2))                          # back to NCHW


# --------------------------------------------------------------------------------------
# pure-JAX reference (for correctness check)
#   quantize=True rounds conv inputs/weights to bf16 to match the MXU numerics of the
#   kernels (tight check); quantize=False is the f32 spec (loose sanity check).
# --------------------------------------------------------------------------------------
def ref_forward(x, params, same_shape, quantize=True):
    q = (lambda a: a.astype(jnp.bfloat16).astype(jnp.float32)) if quantize else (lambda a: a)

    def conv(inp, w, stride, pad):
        return lax.conv_general_dilated(
            q(inp), q(w), (stride, stride), [(pad, pad), (pad, pad)],
            dimension_numbers=("NCHW", "OIHW", "NCHW"),
            precision=lax.Precision.HIGHEST)

    def bn_relu(y, g, b):
        mean = y.mean(axis=(0, 2, 3), keepdims=True)
        var = y.var(axis=(0, 2, 3), keepdims=True)
        yn = (y - mean) * lax.rsqrt(var + EPS) * g.reshape(1, -1, 1, 1) + b.reshape(1, -1, 1, 1)
        return jnp.maximum(yn, 0.0)

    stride = 1 if same_shape else 2
    out = bn_relu(conv(x, params["w1"], stride, 1), params["g1"], params["b1"])
    out = bn_relu(conv(out, params["w2"], 1, 1), params["g2"], params["b2"])
    if not same_shape:
        x = conv(x, params["w3"], stride, 0) + params["b3"].reshape(1, -1, 1, 1)
    return jnp.maximum(x + out, 0.0)


def init_params(key, cin, cout, same_shape):
    ks = jax.random.split(key, 4)
    p = {
        "w1": jax.random.normal(ks[0], (cout, cin, 3, 3), jnp.float32) * 0.1,
        "g1": jnp.ones((cout,), jnp.float32),
        "b1": jnp.zeros((cout,), jnp.float32),
        "w2": jax.random.normal(ks[1], (cout, cout, 3, 3), jnp.float32) * 0.1,
        "g2": jnp.ones((cout,), jnp.float32),
        "b2": jnp.zeros((cout,), jnp.float32),
    }
    if not same_shape:
        p["w3"] = jax.random.normal(ks[2], (cout, cin, 1, 1), jnp.float32) * 0.1
        p["b3"] = jax.random.normal(ks[3], (cout,), jnp.float32) * 0.1
    return p


if __name__ == "__main__":
    key = jax.random.PRNGKey(0)
    kx1, kx2, kp1, kp2 = jax.random.split(key, 4)

    block = jax.jit(resnet_block_pallas, static_argnums=2)

    # case 1: same_shape=True (identity residual, in_channel == out_channel)
    x1 = jax.random.normal(kx1, (2, 8, 16, 16), jnp.float32)
    p1 = init_params(kp1, 8, 8, True)
    out1 = jax.block_until_ready(block(x1, p1, True))
    assert out1.shape == (2, 8, 16, 16)
    assert jnp.allclose(out1, ref_forward(x1, p1, True, quantize=True),
                        atol=1e-2, rtol=1e-2)
    assert jnp.allclose(out1, ref_forward(x1, p1, True, quantize=False),
                        atol=2e-1, rtol=2e-1)

    # case 2: same_shape=False (stride-2 conv1 + 1x1 stride-2 projection residual)
    x2 = jax.random.normal(kx2, (2, 4, 16, 16), jnp.float32)
    p2 = init_params(kp2, 4, 8, False)
    out2 = jax.block_until_ready(block(x2, p2, False))
    assert out2.shape == (2, 8, 8, 8)
    assert jnp.allclose(out2, ref_forward(x2, p2, False, quantize=True),
                        atol=1e-2, rtol=1e-2)
    assert jnp.allclose(out2, ref_forward(x2, p2, False, quantize=False),
                        atol=2e-1, rtol=2e-1)

    print("KERNEL_OK")
</pallas_src>

<mosaic_0001>
module attributes {stable_mosaic.version = 11 : i64} {
  func.func @_bn_act_kernel(%arg0: i32, %arg1: memref<1x16x16x8xf32, #tpu.memory_space<vmem>>, %arg2: memref<1x8xf32, #tpu.memory_space<vmem>>, %arg3: memref<1x8xf32, #tpu.memory_space<vmem>>, %arg4: memref<1x16x16x8xbf16, #tpu.memory_space<vmem>>) attributes {dimension_semantics = [#tpu.dimension_semantics<parallel>], iteration_bounds = array<i64: 2>, scalar_prefetch = 0 : i64, scratch_operands = 0 : i64, tpu.core_type = #tpu.core_type<tc>, window_params = [{transform_indices = @transform_0, window_bounds = array<i64: 1, 16, 16, 8>}, {pipeline_mode = #tpu.pipeline_mode<synchronous>, transform_indices = @transform_1, window_bounds = array<i64: 1, 8>}, {pipeline_mode = #tpu.pipeline_mode<synchronous>, transform_indices = @transform_2, window_bounds = array<i64: 1, 8>}, {transform_indices = @transform_3, window_bounds = array<i64: 1, 16, 16, 8>}]} {
    %c0 = arith.constant 0 : index
    %c0_0 = arith.constant 0 : index
    %c0_1 = arith.constant 0 : index
    %c0_2 = arith.constant 0 : index
    %0 = vector.load %arg1[%c0, %c0_0, %c0_1, %c0_2] : memref<1x16x16x8xf32, #tpu.memory_space<vmem>>, vector<1x16x16x8xf32>
    %c0_3 = arith.constant 0 : index
    %c0_4 = arith.constant 0 : index
    %1 = vector.load %arg2[%c0_3, %c0_4] : memref<1x8xf32, #tpu.memory_space<vmem>>, vector<1x8xf32>
    %2 = vector.shape_cast %1 : vector<1x8xf32> to vector<1x1x1x8xf32>
    %3 = vector.broadcast %2 : vector<1x1x1x8xf32> to vector<1x16x16x8xf32>
    %4 = arith.mulf %0, %3 : vector<1x16x16x8xf32>
    %c0_5 = arith.constant 0 : index
    %c0_6 = arith.constant 0 : index
    %5 = vector.load %arg3[%c0_5, %c0_6] : memref<1x8xf32, #tpu.memory_space<vmem>>, vector<1x8xf32>
    %6 = vector.shape_cast %5 : vector<1x8xf32> to vector<1x1x1x8xf32>
    %7 = vector.broadcast %6 : vector<1x1x1x8xf32> to vector<1x16x16x8xf32>
    %8 = arith.addf %4, %7 : vector<1x16x16x8xf32>
    %cst = arith.constant 0.000000e+00 : f32
    %9 = vector.broadcast %cst : f32 to vector<1x16x16x8xf32>
    %10 = arith.maximumf %8, %9 : vector<1x16x16x8xf32>
    %11 = arith.truncf %10 : vector<1x16x16x8xf32> to vector<1x16x16x8xbf16>
    %c0_7 = arith.constant 0 : index
    %c0_8 = arith.constant 0 : index
    %c0_9 = arith.constant 0 : index
    %c0_10 = arith.constant 0 : index
    %12 = vector.load %arg4[%c0_7, %c0_8, %c0_9, %c0_10] : memref<1x16x16x8xbf16, #tpu.memory_space<vmem>>, vector<1x16x16x8xbf16>
    tpu.vector_store %arg4[%c0_7, %c0_8, %c0_9, %c0_10], %11 {strides = array<i32>} : memref<1x16x16x8xbf16, #tpu.memory_space<vmem>>, vector<1x16x16x8xbf16>,
    return
  }
  func.func @transform_0(%arg0: i32) -> (i32, i32, i32, i32) {
    %c0_i32 = arith.constant 0 : i32
    %c0_i32_0 = arith.constant 0 : i32
    %c0_i32_1 = arith.constant 0 : i32
    %c0_i32_2 = arith.constant 0 : i32
    return %arg0, %c0_i32, %c0_i32_0, %c0_i32_1 : i32, i32, i32, i32
  }
  func.func @transform_1(%arg0: i32) -> (i32, i32) {
    %c0_i32 = arith.constant 0 : i32
    %c0_i32_0 = arith.constant 0 : i32
    %c0_i32_1 = arith.constant 0 : i32
    return %c0_i32, %c0_i32_0 : i32, i32
  }
  func.func @transform_2(%arg0: i32) -> (i32, i32) {
    %c0_i32 = arith.constant 0 : i32
    %c0_i32_0 = arith.constant 0 : i32
    %c0_i32_1 = arith.constant 0 : i32
    return %c0_i32, %c0_i32_0 : i32, i32
  }
  func.func @transform_3(%arg0: i32) -> (i32, i32, i32, i32) {
    %c0_i32 = arith.constant 0 : i32
    %c0_i32_0 = arith.constant 0 : i32
    %c0_i32_1 = arith.constant 0 : i32
    %c0_i32_2 = arith.constant 0 : i32
    return %arg0, %c0_i32, %c0_i32_0, %c0_i32_1 : i32, i32, i32, i32
  }
}

module attributes {stable_mosaic.version = 11 : i64} {
  func.func @_conv_bn_kernel(%arg0: i32, %arg1: i32, %arg2: memref<1x18x18x8xbf16, #tpu.memory_space<vmem>>, %arg3: memref<9x8x8xbf16, #tpu.memory_space<vmem>>, %arg4: memref<1x8xf32, #tpu.memory_space<vmem>>, %arg5: memref<1x8xf32, #tpu.memory_space<vmem>>, %arg6: memref<1x16x16x8xf32, #tpu.memory_space<vmem>>, %arg7: memref<1x8xf32, #tpu.memory_space<vmem>>, %arg8: memref<1x8xf32, #tpu.memory_space<vmem>>, %arg9: memref<1x8xf32, #tpu.memory_space<vmem>>, %arg10: memref<1x8xf32, #tpu.memory_space<vmem>>) attributes {dimension_semantics = [#tpu.dimension_semantics<arbitrary>, #tpu.dimension_semantics<arbitrary>], iteration_bounds = array<i64: 2, 1>, scalar_prefetch = 0 : i64, scratch_operands = 2 : i64, tpu.core_type = #tpu.core_type<tc>, window_params = [{transform_indices = @transform_0, window_bounds = array<i64: 1, 18, 18, 8>}, {pipeline_mode = #tpu.pipeline_mode<synchronous>, transform_indices = @transform_1, window_bounds = array<i64: 9, 8, 8>}, {pipeline_mode = #tpu.pipeline_mode<synchronous>, transform_indices = @transform_2, window_bounds = array<i64: 1, 8>}, {pipeline_mode = #tpu.pipeline_mode<synchronous>, transform_indices = @transform_3, window_bounds = array<i64: 1, 8>}, {transform_indices = @transform_4, window_bounds = array<i64: 1, 16, 16, 8>}, {pipeline_mode = #tpu.pipeline_mode<synchronous>, transform_indices = @transform_5, window_bounds = array<i64: 1, 8>}, {pipeline_mode = #tpu.pipeline_mode<synchronous>, transform_indices = @transform_6, window_bounds = array<i64: 1, 8>}]} {
    %c1_i32 = arith.constant 1 : i32
    %0 = arith.muli %arg0, %c1_i32 : i32
    %1 = arith.addi %0, %arg1 : i32
    %c16_i32 = arith.constant 16 : i32
    %2 = arith.muli %arg1, %c16_i32 : i32
    %c0_i32 = arith.constant 0 : i32
    %3 = arith.cmpi eq, %1, %c0_i32 : i32
    %4 = arith.extui %3 : i1 to i32
    %c0_i32_0 = arith.constant 0 : i32
    %5 = arith.cmpi ne, %4, %c0_i32_0 : i32
    scf.if %5 {
      %cst = arith.constant 0.000000e+00 : f32
      %10 = vector.broadcast %cst : f32 to vector<1x8xf32>
      %c0 = arith.constant 0 : index
      %c0_7 = arith.constant 0 : index
      %11 = vector.load %arg9[%c0, %c0_7] : memref<1x8xf32, #tpu.memory_space<vmem>>, vector<1x8xf32>
      tpu.vector_store %arg9[%c0, %c0_7], %10 {strides = array<i32>} : memref<1x8xf32, #tpu.memory_space<vmem>>, vector<1x8xf32>,
      %cst_8 = arith.constant 0.000000e+00 : f32
      %12 = vector.broadcast %cst_8 : f32 to vector<1x8xf32>
      %c0_9 = arith.constant 0 : index
      %c0_10 = arith.constant 0 : index
      %13 = vector.load %arg10[%c0_9, %c0_10] : memref<1x8xf32, #tpu.memory_space<vmem>>, vector<1x8xf32>
      tpu.vector_store %arg10[%c0_9, %c0_10], %12 {strides = array<i32>} : memref<1x8xf32, #tpu.memory_space<vmem>>, vector<1x8xf32>,
    } else {
    }
    %c0_i32_1 = arith.constant 0 : i32
    %c16_i32_2 = arith.constant 16 : i32
    %6 = arith.addi %c0_i32_1, %c16_i32_2 : i32
    %c1_i32_3 = arith.constant 1 : i32
    scf.for %arg11 = %c0_i32_1 to %6 step %c1_i32_3  : i32 {
      %cst = arith.constant 0.000000e+00 : f32
      %10 = vector.broadcast %cst : f32 to vector<16x8xf32>
      %11 = arith.addi %2, %arg11 : i32
      %c0_i32_7 = arith.constant 0 : i32
      %12 = arith.addi %11, %c0_i32_7 : i32
      %c0 = arith.constant 0 : index
      %13 = arith.index_cast %12 : i32 to index
      %c0_8 = arith.constant 0 : index
      %c0_9 = arith.constant 0 : index
      %14 = vector.load %arg2[%c0, %13, %c0_8, %c0_9] : memref<1x18x18x8xbf16, #tpu.memory_space<vmem>>, vector<1x1x18x8xbf16>
      %15 = vector.shape_cast %14 : vector<1x1x18x8xbf16> to vector<18x8xbf16>
      %16 = vector.extract_strided_slice %15 {offsets = [0, 0], sizes = [16, 8], strides = [1, 1]} : vector<18x8xbf16> to vector<16x8xbf16>
      %c0_10 = arith.constant 0 : index
      %c0_11 = arith.constant 0 : index
      %c0_12 = arith.constant 0 : index
      %17 = vector.load %arg3[%c0_10, %c0_11, %c0_12] : memref<9x8x8xbf16, #tpu.memory_space<vmem>>, vector<1x8x8xbf16>
      %18 = vector.shape_cast %17 : vector<1x8x8xbf16> to vector<8x8xbf16>
      %cst_13 = arith.constant dense<0.000000e+00> : vector<16x8xf32>
      %19 = tpu.matmul %16, %18, %cst_13 {dimension_numbers = #tpu.dot_dimension_numbers<[1], [0], [0], [1], [0, 0, 1, 1], [], []>} : vector<16x8xbf16>, vector<8x8xbf16>, vector<16x8xf32> -> vector<16x8xf32>
      %20 = arith.addf %10, %19 : vector<16x8xf32>
      %21 = vector.extract_strided_slice %15 {offsets = [1, 0], sizes = [16, 8], strides = [1, 1]} : vector<18x8xbf16> to vector<16x8xbf16>
      %c1 = arith.constant 1 : index
      %c0_14 = arith.constant 0 : index
      %c0_15 = arith.constant 0 : index
      %22 = vector.load %arg3[%c1, %c0_14, %c0_15] : memref<9x8x8xbf16, #tpu.memory_space<vmem>>, vector<1x8x8xbf16>
      %23 = vector.shape_cast %22 : vector<1x8x8xbf16> to vector<8x8xbf16>
      %cst_16 = arith.constant dense<0.000000e+00> : vector<16x8xf32>
      %24 = tpu.matmul %21, %23, %cst_16 {dimension_numbers = #tpu.dot_dimension_numbers<[1], [0], [0], [1], [0, 0, 1, 1], [], []>} : vector<16x8xbf16>, vector<8x8xbf16>, vector<16x8xf32> -> vector<16x8xf32>
      %25 = arith.addf %20, %24 : vector<16x8xf32>
      %26 = vector.extract_strided_slice %15 {offsets = [2, 0], sizes = [16, 8], strides = [1, 1]} : vector<18x8xbf16> to vector<16x8xbf16>
      %c2 = arith.constant 2 : index
      %c0_17 = arith.constant 0 : index
      %c0_18 = arith.constant 0 : index
      %27 = vector.load %arg3[%c2, %c0_17, %c0_18] : memref<9x8x8xbf16, #tpu.memory_space<vmem>>, vector<1x8x8xbf16>
      %28 = vector.shape_cast %27 : vector<1x8x8xbf16> to vector<8x8xbf16>
      %cst_19 = arith.constant dense<0.000000e+00> : vector<16x8xf32>
      %29 = tpu.matmul %26, %28, %cst_19 {dimension_numbers = #tpu.dot_dimension_numbers<[1], [0], [0], [1], [0, 0, 1, 1], [], []>} : vector<16x8xbf16>, vector<8x8xbf16>, vector<16x8xf32> -> vector<16x8xf32>
      %30 = arith.addf %25, %29 : vector<16x8xf32>
      %31 = arith.addi %2, %arg11 : i32
      %c1_i32_20 = arith.constant 1 : i32
      %32 = arith.addi %31, %c1_i32_20 : i32
      %c0_21 = arith.constant 0 : index
      %33 = arith.index_cast %32 : i32 to index
      %c0_22 = arith.constant 0 : index
      %c0_23 = arith.constant 0 : index
      %34 = vector.load %arg2[%c0_21, %33, %c0_22, %c0_23] : memref<1x18x18x8xbf16, #tpu.memory_space<vmem>>, vector<1x1x18x8xbf16>
      %35 = vector.shape_cast %34 : vector<1x1x18x8xbf16> to vector<18x8xbf16>
      %36 = vector.extract_strided_slice %35 {offsets = [0, 0], sizes = [16, 8], strides = [1, 1]} : vector<18x8xbf16> to vector<16x8xbf16>
      %c3 = arith.constant 3 : index
      %c0_24 = arith.constant 0 : index
      %c0_25 = arith.constant 0 : index
      %37 = vector.load %arg3[%c3, %c0_24, %c0_25] : memref<9x8x8xbf16, #tpu.memory_space<vmem>>, vector<1x8x8xbf16>
      %38 = vector.shape_cast %37 : vector<1x8x8xbf16> to vector<8x8xbf16>
      %cst_26 = arith.constant dense<0.000000e+00> : vector<16x8xf32>
      %39 = tpu.matmul %36, %38, %cst_26 {dimension_numbers = #tpu.dot_dimension_numbers<[1], [0], [0], [1], [0, 0, 1, 1], [], []>} : vector<16x8xbf16>, vector<8x8xbf16>, vector<16x8xf32> -> vector<16x8xf32>
      %40 = arith.addf %30, %39 : vector<16x8xf32>
      %41 = vector.extract_strided_slice %35 {offsets = [1, 0], sizes = [16, 8], strides = [1, 1]} : vector<18x8xbf16> to vector<16x8xbf16>
      %c4 = arith.constant 4 : index
      %c0_27 = arith.constant 0 : index
      %c0_28 = arith.constant 0 : index
      %42 = vector.load %arg3[%c4, %c0_27, %c0_28] : memref<9x8x8xbf16, #tpu.memory_space<vmem>>, vector<1x8x8xbf16>
      %43 = vector.shape_cast %42 : vector<1x8x8xbf16> to vector<8x8xbf16>
      %cst_29 = arith.constant dense<0.000000e+00> : vector<16x8xf32>
      %44 = tpu.matmul %41, %43, %cst_29 {dimension_numbers = #tpu.dot_dimension_numbers<[1], [0], [0], [1], [0, 0, 1, 1], [], []>} : vector<16x8xbf16>, vector<8x8xbf16>, vector<16x8xf32> -> vector<16x8xf32>
      %45 = arith.addf %40, %44 : vector<16x8xf32>
      %46 = vector.extract_strided_slice %35 {offsets = [2, 0], sizes = [16, 8], strides = [1, 1]} : vector<18x8xbf16> to vector<16x8xbf16>
      %c5 = arith.constant 5 : index
      %c0_30 = arith.constant 0 : index
      %c0_31 = arith.constant 0 : index
      %47 = vector.load %arg3[%c5, %c0_30, %c0_31] : memref<9x8x8xbf16, #tpu.memory_space<vmem>>, vector<1x8x8xbf16>
      %48 = vector.shape_cast %47 : vector<1x8x8xbf16> to vector<8x8xbf16>
      %cst_32 = arith.constant dense<0.000000e+00> : vector<16x8xf32>
      %49 = tpu.matmul %46, %48, %cst_32 {dimension_numbers = #tpu.dot_dimension_numbers<[1], [0], [0], [1], [0, 0, 1, 1], [], []>} : vector<16x8xbf16>, vector<8x8xbf16>, vector<16x8xf32> -> vector<16x8xf32>
      %50 = arith.addf %45, %49 : vector<16x8xf32>
      %51 = arith.addi %2, %arg11 : i32
      %c2_i32 = arith.constant 2 : i32
      %52 = arith.addi %51, %c2_i32 : i32
      %c0_33 = arith.constant 0 : index
      %53 = arith.index_cast %52 : i32 to index
      %c0_34 = arith.constant 0 : index
      %c0_35 = arith.constant 0 : index
      %54 = vector.load %arg2[%c0_33, %53, %c0_34, %c0_35] : memref<1x18x18x8xbf16, #tpu.memory_space<vmem>>, vector<1x1x18x8xbf16>
      %55 = vector.shape_cast %54 : vector<1x1x18x8xbf16> to vector<18x8xbf16>
      %56 = vector.extract_strided_slice %55 {offsets = [0, 0], sizes = [16, 8], strides = [1, 1]} : vector<18x8xbf16> to vector<16x8xbf16>
      %c6 = arith.constant 6 : index
      %c0_36 = arith.constant 0 : index
      %c0_37 = arith.constant 0 : index
      %57 = vector.load %arg3[%c6, %c0_36, %c0_37] : memref<9x8x8xbf16, #tpu.memory_space<vmem>>, vector<1x8x8xbf16>
      %58 = vector.shape_cast %57 : vector<1x8x8xbf16> to vector<8x8xbf16>
      %cst_38 = arith.constant dense<0.000000e+00> : vector<16x8xf32>
      %59 = tpu.matmul %56, %58, %cst_38 {dimension_numbers = #tpu.dot_dimension_numbers<[1], [0], [0], [1], [0, 0, 1, 1], [], []>} : vector<16x8xbf16>, vector<8x8xbf16>, vector<16x8xf32> -> vector<16x8xf32>
      %60 = arith.addf %50, %59 : vector<16x8xf32>
      %61 = vector.extract_strided_slice %55 {offsets = [1, 0], sizes = [16, 8], strides = [1, 1]} : vector<18x8xbf16> to vector<16x8xbf16>
      %c7 = arith.constant 7 : index
      %c0_39 = arith.constant 0 : index
      %c0_40 = arith.constant 0 : index
      %62 = vector.load %arg3[%c7, %c0_39, %c0_40] : memref<9x8x8xbf16, #tpu.memory_space<vmem>>, vector<1x8x8xbf16>
      %63 = vector.shape_cast %62 : vector<1x8x8xbf16> to vector<8x8xbf16>
      %cst_41 = arith.constant dense<0.000000e+00> : vector<16x8xf32>
      %64 = tpu.matmul %61, %63, %cst_41 {dimension_numbers = #tpu.dot_dimension_numbers<[1], [0], [0], [1], [0, 0, 1, 1], [], []>} : vector<16x8xbf16>, vector<8x8xbf16>, vector<16x8xf32> -> vector<16x8xf32>
      %65 = arith.addf %60, %64 : vector<16x8xf32>
      %66 = vector.extract_strided_slice %55 {offsets = [2, 0], sizes = [16, 8], strides = [1, 1]} : vector<18x8xbf16> to vector<16x8xbf16>
      %c8 = arith.constant 8 : index
      %c0_42 = arith.constant 0 : index
      %c0_43 = arith.constant 0 : index
      %67 = vector.load %arg3[%c8, %c0_42, %c0_43] : memref<9x8x8xbf16, #tpu.memory_space<vmem>>, vector<1x8x8xbf16>
      %68 = vector.shape_cast %67 : vector<1x8x8xbf16> to vector<8x8xbf16>
      %cst_44 = arith.constant dense<0.000000e+00> : vector<16x8xf32>
      %69 = tpu.matmul %66, %68, %cst_44 {dimension_numbers = #tpu.dot_dimension_numbers<[1], [0], [0], [1], [0, 0, 1, 1], [], []>} : vector<16x8xbf16>, vector<8x8xbf16>, vector<16x8xf32> -> vector<16x8xf32>
      %70 = arith.addf %65, %69 : vector<16x8xf32>
      %c0_45 = arith.constant 0 : index
      %c0_46 = arith.constant 0 : index
      %71 = vector.load %arg9[%c0_45, %c0_46] : memref<1x8xf32, #tpu.memory_space<vmem>>, vector<1x8xf32>
      %cst_47 = arith.constant dense<0.000000e+00> : vector<8xf32>
      %72 = vector.multi_reduction <add>, %70, %cst_47 [0] : vector<16x8xf32> to vector<8xf32>
      %73 = vector.shape_cast %72 : vector<8xf32> to vector<1x8xf32>
      %74 = arith.addf %71, %73 : vector<1x8xf32>
      %c0_48 = arith.constant 0 : index
      %c0_49 = arith.constant 0 : index
      %75 = vector.load %arg9[%c0_48, %c0_49] : memref<1x8xf32, #tpu.memory_space<vmem>>, vector<1x8xf32>
      tpu.vector_store %arg9[%c0_48, %c0_49], %74 {strides = array<i32>} : memref<1x8xf32, #tpu.memory_space<vmem>>, vector<1x8xf32>,
      %c0_50 = arith.constant 0 : index
      %c0_51 = arith.constant 0 : index
      %76 = vector.load %arg10[%c0_50, %c0_51] : memref<1x8xf32, #tpu.memory_space<vmem>>, vector<1x8xf32>
      %77 = arith.mulf %70, %70 : vector<16x8xf32>
      %cst_52 = arith.constant dense<0.000000e+00> : vector<8xf32>
      %78 = vector.multi_reduction <add>, %77, %cst_52 [0] : vector<16x8xf32> to vector<8xf32>
      %79 = vector.shape_cast %78 : vector<8xf32> to vector<1x8xf32>
      %80 = arith.addf %76, %79 : vector<1x8xf32>
      %c0_53 = arith.constant 0 : index
      %c0_54 = arith.constant 0 : index
      %81 = vector.load %arg10[%c0_53, %c0_54] : memref<1x8xf32, #tpu.memory_space<vmem>>, vector<1x8xf32>
      tpu.vector_store %arg10[%c0_53, %c0_54], %80 {strides = array<i32>} : memref<1x8xf32, #tpu.memory_space<vmem>>, vector<1x8xf32>,
      %c0_55 = arith.constant 0 : index
      %82 = arith.index_cast %arg11 : i32 to index
      %c0_56 = arith.constant 0 : index
      %c0_57 = arith.constant 0 : index
      %83 = vector.load %arg6[%c0_55, %82, %c0_56, %c0_57] : memref<1x16x16x8xf32, #tpu.memory_space<vmem>>, vector<1x1x16x8xf32>
      %84 = vector.shape_cast %83 : vector<1x1x16x8xf32> to vector<16x8xf32>
      %85 = vector.shape_cast %70 : vector<16x8xf32> to vector<1x1x16x8xf32>
      tpu.vector_store %arg6[%c0_55, %82, %c0_56, %c0_57], %85 {strides = array<i32>} : memref<1x16x16x8xf32, #tpu.memory_space<vmem>>, vector<1x1x16x8xf32>,
    }
    %c16_i32_4 = arith.constant 16 : i32
    %c1_i32_5 = arith.constant 1 : i32
    %7 = arith.cmpi eq, %1, %c1_i32_5 : i32
    %8 = arith.extui %7 : i1 to i32
    %c0_i32_6 = arith.constant 0 : i32
    %9 = arith.cmpi ne, %8, %c0_i32_6 : i32
    scf.if %9 {
      %c0 = arith.constant 0 : index
      %c0_7 = arith.constant 0 : index
      %10 = vector.load %arg9[%c0, %c0_7] : memref<1x8xf32, #tpu.memory_space<vmem>>, vector<1x8xf32>
      %cst = arith.constant 5.120000e+02 : f32
      %11 = vector.broadcast %cst : f32 to vector<1x8xf32>
      %12 = arith.divf %10, %11 : vector<1x8xf32>
      %c0_8 = arith.constant 0 : index
      %c0_9 = arith.constant 0 : index
      %13 = vector.load %arg10[%c0_8, %c0_9] : memref<1x8xf32, #tpu.memory_space<vmem>>, vector<1x8xf32>
      %cst_10 = arith.constant 5.120000e+02 : f32
      %14 = vector.broadcast %cst_10 : f32 to vector<1x8xf32>
      %15 = arith.divf %13, %14 : vector<1x8xf32>
      %16 = arith.mulf %12, %12 : vector<1x8xf32>
      %17 = arith.subf %15, %16 : vector<1x8xf32>
      %c0_11 = arith.constant 0 : index
      %c0_12 = arith.constant 0 : index
      %18 = vector.load %arg4[%c0_11, %c0_12] : memref<1x8xf32, #tpu.memory_space<vmem>>, vector<1x8xf32>
      %cst_13 = arith.constant 9.99999974E-6 : f32
      %19 = vector.broadcast %cst_13 : f32 to vector<1x8xf32>
      %20 = arith.addf %17, %19 : vector<1x8xf32>
      %21 = math.rsqrt %20 : vector<1x8xf32>
      %22 = arith.mulf %18, %21 : vector<1x8xf32>
      %c0_14 = arith.constant 0 : index
      %c0_15 = arith.constant 0 : index
      %23 = vector.load %arg7[%c0_14, %c0_15] : memref<1x8xf32, #tpu.memory_space<vmem>>, vector<1x8xf32>
      tpu.vector_store %arg7[%c0_14, %c0_15], %22 {strides = array<i32>} : memref<1x8xf32, #tpu.memory_space<vmem>>, vector<1x8xf32>,
      %c0_16 = arith.constant 0 : index
      %c0_17 = arith.constant 0 : index
      %24 = vector.load %arg5[%c0_16, %c0_17] : memref<1x8xf32, #tpu.memory_space<vmem>>, vector<1x8xf32>
      %25 = arith.mulf %12, %22 : vector<1x8xf32>
      %26 = arith.subf %24, %25 : vector<1x8xf32>
      %c0_18 = arith.constant 0 : index
      %c0_19 = arith.constant 0 : index
      %27 = vector.load %arg8[%c0_18, %c0_19] : memref<1x8xf32, #tpu.memory_space<vmem>>, vector<1x8xf32>
      tpu.vector_store %arg8[%c0_18, %c0_19], %26 {strides = array<i32>} : memref<1x8xf32, #tpu.memory_space<vmem>>, vector<1x8xf32>,
    } else {
    }
    return
  }
  func.func @transform_0(%arg0: i32, %arg1: i32) -> (i32, i32, i32, i32) {
    %c0_i32 = arith.constant 0 : i32
    %c0_i32_0 = arith.constant 0 : i32
    %c0_i32_1 = arith.constant 0 : i32
    %c0_i32_2 = arith.constant 0 : i32
    return %arg0, %c0_i32, %c0_i32_0, %c0_i32_1 : i32, i32, i32, i32
  }
  func.func @transform_1(%arg0: i32, %arg1: i32) -> (i32, i32, i32) {
    %c0_i32 = arith.constant 0 : i32
    %c0_i32_0 = arith.constant 0 : i32
    %c0_i32_1 = arith.constant 0 : i32
    %c0_i32_2 = arith.constant 0 : i32
    return %c0_i32, %c0_i32_0, %c0_i32_1 : i32, i32, i32
  }
  func.func @transform_2(%arg0: i32, %arg1: i32) -> (i32, i32) {
    %c0_i32 = arith.constant 0 : i32
    %c0_i32_0 = arith.constant 0 : i32
    %c0_i32_1 = arith.constant 0 : i32
    return %c0_i32, %c0_i32_0 : i32, i32
  }
  func.func @transform_3(%arg0: i32, %arg1: i32) -> (i32, i32) {
    %c0_i32 = arith.constant 0 : i32
    %c0_i32_0 = arith.constant 0 : i32
    %c0_i32_1 = arith.constant 0 : i32
    return %c0_i32, %c0_i32_0 : i32, i32
  }
  func.func @transform_4(%arg0: i32, %arg1: i32) -> (i32, i32, i32, i32) {
    %c0_i32 = arith.constant 0 : i32
    %c0_i32_0 = arith.constant 0 : i32
    %c0_i32_1 = arith.constant 0 : i32
    return %arg0, %arg1, %c0_i32, %c0_i32_0 : i32, i32, i32, i32
  }
  func.func @transform_5(%arg0: i32, %arg1: i32) -> (i32, i32) {
    %c0_i32 = arith.constant 0 : i32
    %c0_i32_0 = arith.constant 0 : i32
    %c0_i32_1 = arith.constant 0 : i32
    return %c0_i32, %c0_i32_0 : i32, i32
  }
  func.func @transform_6(%arg0: i32, %arg1: i32) -> (i32, i32) {
    %c0_i32 = arith.constant 0 : i32
    %c0_i32_0 = arith.constant 0 : i32
    %c0_i32_1 = arith.constant 0 : i32
    return %c0_i32, %c0_i32_0 : i32, i32
  }
}

module attributes {stable_mosaic.version = 11 : i64} {
  func.func @_bn_act_add_kernel(%arg0: i32, %arg1: memref<1x16x16x8xf32, #tpu.memory_space<vmem>>, %arg2: memref<1x16x16x8xf32, #tpu.memory_space<vmem>>, %arg3: memref<1x8xf32, #tpu.memory_space<vmem>>, %arg4: memref<1x8xf32, #tpu.memory_space<vmem>>, %arg5: memref<1x16x16x8xf32, #tpu.memory_space<vmem>>) attributes {dimension_semantics = [#tpu.dimension_semantics<parallel>], iteration_bounds = array<i64: 2>, scalar_prefetch = 0 : i64, scratch_operands = 0 : i64, tpu.core_type = #tpu.core_type<tc>, window_params = [{transform_indices = @transform_0, window_bounds = array<i64: 1, 16, 16, 8>}, {transform_indices = @transform_1, window_bounds = array<i64: 1, 16, 16, 8>}, {pipeline_mode = #tpu.pipeline_mode<synchronous>, transform_indices = @transform_2, window_bounds = array<i64: 1, 8>}, {pipeline_mode = #tpu.pipeline_mode<synchronous>, transform_indices = @transform_3, window_bounds = array<i64: 1, 8>}, {transform_indices = @transform_4, window_bounds = array<i64: 1, 16, 16, 8>}]} {
    %c0 = arith.constant 0 : index
    %c0_0 = arith.constant 0 : index
    %c0_1 = arith.constant 0 : index
    %c0_2 = arith.constant 0 : index
    %0 = vector.load %arg1[%c0, %c0_0, %c0_1, %c0_2] : memref<1x16x16x8xf32, #tpu.memory_space<vmem>>, vector<1x16x16x8xf32>
    %c0_3 = arith.constant 0 : index
    %c0_4 = arith.constant 0 : index
    %1 = vector.load %arg3[%c0_3, %c0_4] : memref<1x8xf32, #tpu.memory_space<vmem>>, vector<1x8xf32>
    %2 = vector.shape_cast %1 : vector<1x8xf32> to vector<1x1x1x8xf32>
    %3 = vector.broadcast %2 : vector<1x1x1x8xf32> to vector<1x16x16x8xf32>
    %4 = arith.mulf %0, %3 : vector<1x16x16x8xf32>
    %c0_5 = arith.constant 0 : index
    %c0_6 = arith.constant 0 : index
    %5 = vector.load %arg4[%c0_5, %c0_6] : memref<1x8xf32, #tpu.memory_space<vmem>>, vector<1x8xf32>
    %6 = vector.shape_cast %5 : vector<1x8xf32> to vector<1x1x1x8xf32>
    %7 = vector.broadcast %6 : vector<1x1x1x8xf32> to vector<1x16x16x8xf32>
    %8 = arith.addf %4, %7 : vector<1x16x16x8xf32>
    %cst = arith.constant 0.000000e+00 : f32
    %9 = vector.broadcast %cst : f32 to vector<1x16x16x8xf32>
    %10 = arith.maximumf %8, %9 : vector<1x16x16x8xf32>
    %c0_7 = arith.constant 0 : index
    %c0_8 = arith.constant 0 : index
    %c0_9 = arith.constant 0 : index
    %c0_10 = arith.constant 0 : index
    %11 = vector.load %arg2[%c0_7, %c0_8, %c0_9, %c0_10] : memref<1x16x16x8xf32, #tpu.memory_space<vmem>>, vector<1x16x16x8xf32>
    %12 = arith.addf %10, %11 : vector<1x16x16x8xf32>
    %cst_11 = arith.constant 0.000000e+00 : f32
    %13 = vector.broadcast %cst_11 : f32 to vector<1x16x16x8xf32>
    %14 = arith.maximumf %12, %13 : vector<1x16x16x8xf32>
    %c0_12 = arith.constant 0 : index
    %c0_13 = arith.constant 0 : index
    %c0_14 = arith.constant 0 : index
    %c0_15 = arith.constant 0 : index
    %15 = vector.load %arg5[%c0_12, %c0_13, %c0_14, %c0_15] : memref<1x16x16x8xf32, #tpu.memory_space<vmem>>, vector<1x16x16x8xf32>
    tpu.vector_store %arg5[%c0_12, %c0_13, %c0_14, %c0_15], %14 {strides = array<i32>} : memref<1x16x16x8xf32, #tpu.memory_space<vmem>>, vector<1x16x16x8xf32>,
    return
  }
  func.func @transform_0(%arg0: i32) -> (i32, i32, i32, i32) {
    %c0_i32 = arith.constant 0 : i32
    %c0_i32_0 = arith.constant 0 : i32
    %c0_i32_1 = arith.constant 0 : i32
    %c0_i32_2 = arith.constant 0 : i32
    return %arg0, %c0_i32, %c0_i32_0, %c0_i32_1 : i32, i32, i32, i32
  }
  func.func @transform_1(%arg0: i32) -> (i32, i32, i32, i32) {
    %c0_i32 = arith.constant 0 : i32
    %c0_i32_0 = arith.constant 0 : i32
    %c0_i32_1 = arith.constant 0 : i32
    %c0_i32_2 = arith.constant 0 : i32
    return %arg0, %c0_i32, %c0_i32_0, %c0_i32_1 : i32, i32, i32, i32
  }
  func.func @transform_2(%arg0: i32) -> (i32, i32) {
    %c0_i32 = arith.constant 0 : i32
    %c0_i32_0 = arith.constant 0 : i32
    %c0_i32_1 = arith.constant 0 : i32
    return %c0_i32, %c0_i32_0 : i32, i32
  }
  func.func @transform_3(%arg0: i32) -> (i32, i32) {
    %c0_i32 = arith.constant 0 : i32
    %c0_i32_0 = arith.constant 0 : i32
    %c0_i32_1 = arith.constant 0 : i32
    return %c0_i32, %c0_i32_0 : i32, i32
  }
  func.func @transform_4(%arg0: i32) -> (i32, i32, i32, i32) {
    %c0_i32 = arith.constant 0 : i32
    %c0_i32_0 = arith.constant 0 : i32
    %c0_i32_1 = arith.constant 0 : i32
    %c0_i32_2 = arith.constant 0 : i32
    return %arg0, %c0_i32, %c0_i32_0, %c0_i32_1 : i32, i32, i32, i32
  }
}

</mosaic_0001>

<llo_original>
// kernel: resnet_block_pallas.7
$region0: #{resnet_block_pallas.7}
  #allocation0 [shape = 'u32[]', space=smem, size = 0x4, offset = 0x4, fixed_abs, tag = 'smem constant byte address 0x4 - core index']
  #allocation1 [shape = 'u32[144,128]{1,0:T(1,128)}', space=vmem, size = 0x12000, scoped, tag = 'internal scratch']
  %s0 = inlined_call_operand.vmem [shape: f32[2,16,16,8], index: 0, kind: input, shape index: {}]
  %s1 = inlined_call_operand.vmem [shape: f32[2,16,16,8], index: 1, kind: input, shape index: {}]
  %s2 = inlined_call_operand.vmem [shape: f32[1,8], index: 2, kind: input, shape index: {}]
  %s3 = inlined_call_operand.vmem [shape: f32[1,8], index: 3, kind: input, shape index: {}]
  %s4 = inlined_call_operand.vmem [shape: f32[2,16,16,8], index: 4, kind: output, shape index: {}]
  %s5 = sld [smem:[#allocation0]]
  $region49: #{resnet_block_pallas.7} parent=0
    _
  %s7 = ssub.s32 1, %s5
  %s8 = scalar_select 0, %s7, %s5
  loop: start=0, step=1, limit=4
  $region2: #{resnet_block_pallas.7} parent=0 // loop_pre_header
    _
  $region3: #{resnet_block_pallas.7} parent=0 // loop_header
    %s10 = sphi 0, %s14
    %p11 = scmp.ge.s32.totalorder %s10, 4
    %s20 = sphi 0, %s22
    %s23 = sphi 0, %s20
    %s24 = sphi 0, %s23
    %s40 = sphi 0, %s24
    %s46 = sphi 0, %s48
    %s49 = sphi 0, %s46
    %s50 = sphi 0, %s49
    %s66 = sphi 0, %s50
    %s70 = sphi 0, %s70
    %s72 = sphi 0, %s70
    %s73 = sphi 0, %s72
    %s87 = sphi 0, %s73
    %s91 = sphi 0, %s91
    %s93 = sphi 0, %s91
    %s94 = sphi 0, %s93
    %s108 = sphi 0, %s94
    %s114 = sphi 0, %s116
    %s117 = sphi 0, %s114
    %s118 = sphi 0, %s117
    %s134 = sphi 0, %s118
  $region4: #{resnet_block_pallas.7} parent=0 // loop_header_branch
    %13 = sbr.rel (%p11) target = $region8
  $region5: #{resnet_block_pallas.7} parent=0 // loop_body
    %s15 = ssub.s32 %s10, 1
    %s16 = ssub.s32 %s10, 2
    %s17 = sadd.s32 %s10, 1
    %s18 = ssub.s32 %s10, %s17
    %p19 = scmp.eq.s32.totalorder %s18, 0
    %s21 = sadd.s32 %s20, 1
    %s22 = scalar_select %p19, %s20, %s21
    %p25 = pneg %p19
    %p26 = scmp.eq.s32.totalorder %s10, 1
    %p27 = por %p25, %p26
    %p28 = scmp.ne.s32.totalorder %s20, %s23
    %p29 = scmp.eq.s32.totalorder %s10, 0
    %p30 = por %p28, %p29
    %p31 = scmp.ne.s32.totalorder %s20, %s23
    %p32 = scmp.eq.s32.totalorder %s15, 1
    %p33 = por %p31, %p32
    %p34 = scmp.ne.s32.totalorder %s23, %s24
    %p35 = scmp.eq.s32.totalorder %s15, 0
    %p36 = por %p34, %p35
    %p37 = scmp.ne.s32.totalorder %s23, %s24
    %p38 = scmp.eq.s32.totalorder %s16, 1
    %p39 = por %p37, %p38
    %p41 = scmp.ne.s32.totalorder %s24, %s40
    %p42 = scmp.eq.s32.totalorder %s16, 0
    %p43 = por %p41, %p42
    %s44 = ssub.s32 %s10, %s17
    %p45 = scmp.eq.s32.totalorder %s44, 0
    %s47 = sadd.s32 %s46, 1
    %s48 = scalar_select %p45, %s46, %s47
    %p51 = pneg %p45
    %p52 = scmp.eq.s32.totalorder %s10, 1
    %p53 = por %p51, %p52
    %p54 = scmp.ne.s32.totalorder %s46, %s49
    %p55 = scmp.eq.s32.totalorder %s10, 0
    %p56 = por %p54, %p55
    %p57 = scmp.ne.s32.totalorder %s46, %s49
    %p58 = scmp.eq.s32.totalorder %s15, 1
    %p59 = por %p57, %p58
    %p60 = scmp.ne.s32.totalorder %s49, %s50
    %p61 = scmp.eq.s32.totalorder %s15, 0
    %p62 = por %p60, %p61
    %p63 = scmp.ne.s32.totalorder %s49, %s50
    %p64 = scmp.eq.s32.totalorder %s16, 1
    %p65 = por %p63, %p64
    %p67 = scmp.ne.s32.totalorder %s50, %s66
    %p68 = scmp.eq.s32.totalorder %s16, 0
    %p69 = por %p67, %p68
    %s71 = sadd.s32 %s70, 1
    %p74 = scmp.eq.s32.totalorder %s10, 1
    %p75 = scmp.ne.s32.totalorder %s70, %s72
    %p76 = scmp.eq.s32.totalorder %s10, 0
    %p77 = por %p75, %p76
    %p78 = scmp.ne.s32.totalorder %s70, %s72
    %p79 = scmp.eq.s32.totalorder %s15, 1
    %p80 = por %p78, %p79
    %p81 = scmp.ne.s32.totalorder %s72, %s73
    %p82 = scmp.eq.s32.totalorder %s15, 0
    %p83 = por %p81, %p82
    %p84 = scmp.ne.s32.totalorder %s72, %s73
    %p85 = scmp.eq.s32.totalorder %s16, 1
    %p86 = por %p84, %p85
    %p88 = scmp.ne.s32.totalorder %s73, %s87
    %p89 = scmp.eq.s32.totalorder %s16, 0
    %p90 = por %p88, %p89
    %s92 = sadd.s32 %s91, 1
    %p95 = scmp.eq.s32.totalorder %s10, 1
    %p96 = scmp.ne.s32.totalorder %s91, %s93
    %p97 = scmp.eq.s32.totalorder %s10, 0
    %p98 = por %p96, %p97
    %p99 = scmp.ne.s32.totalorder %s91, %s93
    %p100 = scmp.eq.s32.totalorder %s15, 1
    %p101 = por %p99, %p100
    %p102 = scmp.ne.s32.totalorder %s93, %s94
    %p103 = scmp.eq.s32.totalorder %s15, 0
    %p104 = por %p102, %p103
    %p105 = scmp.ne.s32.totalorder %s93, %s94
    %p106 = scmp.eq.s32.totalorder %s16, 1
    %p107 = por %p105, %p106
    %p109 = scmp.ne.s32.totalorder %s94, %s108
    %p110 = scmp.eq.s32.totalorder %s16, 0
    %p111 = por %p109, %p110
    %s112 = ssub.s32 %s10, %s17
    %p113 = scmp.eq.s32.totalorder %s112, 0
    %s115 = sadd.s32 %s114, 1
    %s116 = scalar_select %p113, %s114, %s115
    %p119 = pneg %p113
    %p120 = scmp.eq.s32.totalorder %s10, 1
    %p121 = por %p119, %p120
    %p122 = scmp.ne.s32.totalorder %s114, %s117
    %p123 = scmp.eq.s32.totalorder %s10, 0
    %p124 = por %p122, %p123
    %p125 = scmp.ne.s32.totalorder %s114, %s117
    %p126 = scmp.eq.s32.totalorder %s15, 1
    %p127 = por %p125, %p126
    %p128 = scmp.ne.s32.totalorder %s117, %s118
    %p129 = scmp.eq.s32.totalorder %s15, 0
    %p130 = por %p128, %p129
    %p131 = scmp.ne.s32.totalorder %s117, %s118
    %p132 = scmp.eq.s32.totalorder %s16, 1
    %p133 = por %p131, %p132
    %p135 = scmp.ne.s32.totalorder %s118, %s134
    %p136 = scmp.eq.s32.totalorder %s16, 0
    %p137 = por %p135, %p136
    %p138 = scmp.le.s32.totalorder 1, %s10
    %p139 = scmp.lt.s32.totalorder %s10, 3
    %p140 = pnand %p138, %p139
    %p141 = pneg %p140
    // Predicated region
    $region9: #{resnet_block_pallas.7} parent=5 // pred_check
      _
    $region10: #{resnet_block_pallas.7} parent=5 // pred_check_branch
      %143 = sbr.rel (%p140) target = $region12
    $region11: #{resnet_block_pallas.7} parent=5 // pred_region
      %s144 = ssub.s32 %s10, 1
      // Predicated region
      $region13: #{resnet_block_pallas.7} parent=11 // pred_check
        %p145 = pneg %p83
      $region14: #{resnet_block_pallas.7} parent=11 // pred_check_branch
        %147 = sbr.rel (%p145) target = $region16
      $region15: #{resnet_block_pallas.7} parent=11 // pred_region
        _
      $region16: #{resnet_block_pallas.7} parent=11 // pred_fallthru
        _
      // Predicated region
      $region17: #{resnet_block_pallas.7} parent=11 // pred_check
        %p148 = pneg %p104
      $region18: #{resnet_block_pallas.7} parent=11 // pred_check_branch
        %150 = sbr.rel (%p148) target = $region20
      $region19: #{resnet_block_pallas.7} parent=11 // pred_region
        _
      $region20: #{resnet_block_pallas.7} parent=11 // pred_fallthru
        _
    $region12: #{resnet_block_pallas.7} parent=5 // pred_fallthru
      _
    %p151 = scmp.lt.s32.totalorder %s10, 2
    // Predicated region
    $region21: #{resnet_block_pallas.7} parent=5 // pred_check
      %p152 = pneg %p151
    $region22: #{resnet_block_pallas.7} parent=5 // pred_check_branch
      %154 = sbr.rel (%p152) target = $region24
    $region23: #{resnet_block_pallas.7} parent=5 // pred_region
      // Predicated region
      $region25: #{resnet_block_pallas.7} parent=23 // pred_check
        %p155 = pneg %p30
      $region26: #{resnet_block_pallas.7} parent=23 // pred_check_branch
        %157 = sbr.rel (%p155) target = $region28
      $region27: #{resnet_block_pallas.7} parent=23 // pred_region
        %p158 = scmp.lt.s32.totalorder %s10, 1
        %s159 = scalar_select %p158, %s10, 1
        %s160 = smul.addr %s159, 32
        %s161 = smul.addr %s160, 8
        %s162 = scalar_lea.vmem %s0, %s161
      $region28: #{resnet_block_pallas.7} parent=23 // pred_fallthru
        _
      // Predicated region
      $region29: #{resnet_block_pallas.7} parent=23 // pred_check
        %p163 = pneg %p56
      $region30: #{resnet_block_pallas.7} parent=23 // pred_check_branch
        %165 = sbr.rel (%p163) target = $region32
      $region31: #{resnet_block_pallas.7} parent=23 // pred_region
        %p166 = scmp.lt.s32.totalorder %s10, 1
        %s167 = scalar_select %p166, %s10, 1
        %s168 = smul.addr %s167, 32
        %s169 = smul.addr %s168, 8
        %s170 = scalar_lea.vmem %s1, %s169
      $region32: #{resnet_block_pallas.7} parent=23 // pred_fallthru
        _
    $region24: #{resnet_block_pallas.7} parent=5 // pred_fallthru
      _
    %p171 = scmp.le.s32.totalorder 1, %s10
    %p172 = scmp.lt.s32.totalorder %s10, 3
    %p173 = pnand %p171, %p172
    %p174 = pneg %p173
    // Predicated region
    $region33: #{resnet_block_pallas.7} parent=5 // pred_check
      _
    $region34: #{resnet_block_pallas.7} parent=5 // pred_check_branch
      %176 = sbr.rel (%p173) target = $region36
    $region35: #{resnet_block_pallas.7} parent=5 // pred_region
      %s177 = ssub.s32 %s10, 1
      %p178 = scmp.lt.s32.totalorder %s15, 1
      %s179 = scalar_select %p178, %s15, 1
      %s180 = smul.addr %s179, 32
      %s181 = smul.addr %s180, 8
      %s182 = scalar_lea.vmem %s0, %s181
      %p183 = pneg %p36
      %p184 = pneg %p33
      %p185 = scmp.lt.s32.totalorder %s15, 1
      %s186 = scalar_select %p185, %s15, 1
      %s187 = smul.addr %s186, 32
      %s188 = smul.addr %s187, 8
      %s189 = scalar_lea.vmem %s1, %s188
      %p190 = pneg %p62
      %p191 = pneg %p59
      %p192 = pneg %p83
      %p193 = pneg %p80
      %p194 = pneg %p104
      %p195 = pneg %p101
      %p196 = pneg %p130
      %p197 = pneg %p127
      %p198 = scmp.lt.s32.totalorder %s15, 1
      %s199 = scalar_select %p198, %s15, 1
      %s200 = smul.addr %s199, 32
      %s201 = smul.addr %s200, 8
      %s202 = scalar_lea.vmem %s4, %s201
      %p203 = scmp.lt.s32.totalorder %s15, 1
      %s204 = scalar_select %p203, %s15, 1
      %s205 = smul.addr %s204, 32
      %s206 = smul.addr %s205, 8
      %s207 = scalar_lea.vmem %s0, %s206
      %p208 = scmp.lt.s32.totalorder %s15, 1
      %s209 = scalar_select %p208, %s15, 1
      %s210 = smul.addr %s209, 32
      %s211 = smul.addr %s210, 8
      %s212 = scalar_lea.vmem %s1, %s211
      %p213 = scmp.lt.s32.totalorder %s15, 1
      %s214 = scalar_select %p213, %s15, 1
      %s215 = smul.addr %s214, 32
      %s216 = smul.addr %s215, 8
      %s217 = scalar_lea.vmem %s4, %s216
      %v218 = vld [vmem:[%s207] sm:$0xff]
      %v219 = vld [vmem:[%s207 + $0x8] sm:$0xff]
      %v220 = vld [vmem:[%s207 + $0x10] sm:$0xff]
      %v221 = vld [vmem:[%s207 + $0x18] sm:$0xff]
      %v222 = vld [vmem:[%s207 + $0x20] sm:$0xff]
      %v223 = vld [vmem:[%s207 + $0x28] sm:$0xff]
      %v224 = vld [vmem:[%s207 + $0x30] sm:$0xff]
      %v225 = vld [vmem:[%s207 + $0x38] sm:$0xff]
      %v226 = vld [vmem:[%s207 + $0x40] sm:$0xff]
      %v227 = vld [vmem:[%s207 + $0x48] sm:$0xff]
      %v228 = vld [vmem:[%s207 + $0x50] sm:$0xff]
      %v229 = vld [vmem:[%s207 + $0x58] sm:$0xff]
      %v230 = vld [vmem:[%s207 + $0x60] sm:$0xff]
      %v231 = vld [vmem:[%s207 + $0x68] sm:$0xff]
      %v232 = vld [vmem:[%s207 + $0x70] sm:$0xff]
      %v233 = vld [vmem:[%s207 + $0x78] sm:$0xff]
      %v234 = vld [vmem:[%s207 + $0x80] sm:$0xff]
      %v235 = vld [vmem:[%s207 + $0x88] sm:$0xff]
      %v236 = vld [vmem:[%s207 + $0x90] sm:$0xff]
      %v237 = vld [vmem:[%s207 + $0x98] sm:$0xff]
      %v238 = vld [vmem:[%s207 + $0xa0] sm:$0xff]
      %v239 = vld [vmem:[%s207 + $0xa8] sm:$0xff]
      %v240 = vld [vmem:[%s207 + $0xb0] sm:$0xff]
      %v241 = vld [vmem:[%s207 + $0xb8] sm:$0xff]
      %v242 = vld [vmem:[%s207 + $0xc0] sm:$0xff]
      %v243 = vld [vmem:[%s207 + $0xc8] sm:$0xff]
      %v244 = vld [vmem:[%s207 + $0xd0] sm:$0xff]
      %v245 = vld [vmem:[%s207 + $0xd8] sm:$0xff]
      %v246 = vld [vmem:[%s207 + $0xe0] sm:$0xff]
      %v247 = vld [vmem:[%s207 + $0xe8] sm:$0xff]
      %v248 = vld [vmem:[%s207 + $0xf0] sm:$0xff]
      %v249 = vld [vmem:[%s207 + $0xf8] sm:$0xff]
      %v250 = vld [vmem:[%s2] sm:$0x1]
      %v252 = vlaneseq
      %v253 = vshrl.u32 %v252, 7
      %v254 = vsub.s32 0, %v253
      %v255 = vrot.slane %v250, %v254
      %v257 = vmul.f32 %v218, %v255
      %v258 = vmul.f32 %v219, %v255
      %v259 = vmul.f32 %v220, %v255
      %v260 = vmul.f32 %v221, %v255
      %v261 = vmul.f32 %v222, %v255
      %v262 = vmul.f32 %v223, %v255
      %v263 = vmul.f32 %v224, %v255
      %v264 = vmul.f32 %v225, %v255
      %v265 = vmul.f32 %v226, %v255
      %v266 = vmul.f32 %v227, %v255
      %v267 = vmul.f32 %v228, %v255
      %v268 = vmul.f32 %v229, %v255
      %v269 = vmul.f32 %v230, %v255
      %v270 = vmul.f32 %v231, %v255
      %v271 = vmul.f32 %v232, %v255
      %v272 = vmul.f32 %v233, %v255
      %v273 = vmul.f32 %v234, %v255
      %v274 = vmul.f32 %v235, %v255
      %v275 = vmul.f32 %v236, %v255
      %v276 = vmul.f32 %v237, %v255
      %v277 = vmul.f32 %v238, %v255
      %v278 = vmul.f32 %v239, %v255
      %v279 = vmul.f32 %v240, %v255
      %v280 = vmul.f32 %v241, %v255
      %v281 = vmul.f32 %v242, %v255
      %v282 = vmul.f32 %v243, %v255
      %v283 = vmul.f32 %v244, %v255
      %v284 = vmul.f32 %v245, %v255
      %v285 = vmul.f32 %v246, %v255
      %v286 = vmul.f32 %v247, %v255
      %v287 = vmul.f32 %v248, %v255
      %v288 = vmul.f32 %v249, %v255
      %v289 = vld [vmem:[%s3] sm:$0x1]
      %v291 = vlaneseq
      %v292 = vshrl.u32 %v291, 7
      %v293 = vsub.s32 0, %v292
      %v294 = vrot.slane %v289, %v293
      %v296 = vadd.f32 %v257, %v294
      %v297 = vadd.f32 %v258, %v294
      %v298 = vadd.f32 %v259, %v294
      %v299 = vadd.f32 %v260, %v294
      %v300 = vadd.f32 %v261, %v294
      %v301 = vadd.f32 %v262, %v294
      %v302 = vadd.f32 %v263, %v294
      %v303 = vadd.f32 %v264, %v294
      %v304 = vadd.f32 %v265, %v294
      %v305 = vadd.f32 %v266, %v294
      %v306 = vadd.f32 %v267, %v294
      %v307 = vadd.f32 %v268, %v294
      %v308 = vadd.f32 %v269, %v294
      %v309 = vadd.f32 %v270, %v294
      %v310 = vadd.f32 %v271, %v294
      %v311 = vadd.f32 %v272, %v294
      %v312 = vadd.f32 %v273, %v294
      %v313 = vadd.f32 %v274, %v294
      %v314 = vadd.f32 %v275, %v294
      %v315 = vadd.f32 %v276, %v294
      %v316 = vadd.f32 %v277, %v294
      %v317 = vadd.f32 %v278, %v294
      %v318 = vadd.f32 %v279, %v294
      %v319 = vadd.f32 %v280, %v294
      %v320 = vadd.f32 %v281, %v294
      %v321 = vadd.f32 %v282, %v294
      %v322 = vadd.f32 %v283, %v294
      %v323 = vadd.f32 %v284, %v294
      %v324 = vadd.f32 %v285, %v294
      %v325 = vadd.f32 %v286, %v294
      %v326 = vadd.f32 %v287, %v294
      %v327 = vadd.f32 %v288, %v294
      %v328 = vmax.f32 %v296, 0.0
      %v329 = vmax.f32 %v297, 0.0
      %v330 = vmax.f32 %v298, 0.0
      %v331 = vmax.f32 %v299, 0.0
      %v332 = vmax.f32 %v300, 0.0
      %v333 = vmax.f32 %v301, 0.0
      %v334 = vmax.f32 %v302, 0.0
      %v335 = vmax.f32 %v303, 0.0
      %v336 = vmax.f32 %v304, 0.0
      %v337 = vmax.f32 %v305, 0.0
      %v338 = vmax.f32 %v306, 0.0
      %v339 = vmax.f32 %v307, 0.0
      %v340 = vmax.f32 %v308, 0.0
      %v341 = vmax.f32 %v309, 0.0
      %v342 = vmax.f32 %v310, 0.0
      %v343 = vmax.f32 %v311, 0.0
      %v344 = vmax.f32 %v312, 0.0
      %v345 = vmax.f32 %v313, 0.0
      %v346 = vmax.f32 %v314, 0.0
      %v347 = vmax.f32 %v315, 0.0
      %v348 = vmax.f32 %v316, 0.0
      %v349 = vmax.f32 %v317, 0.0
      %v350 = vmax.f32 %v318, 0.0
      %v351 = vmax.f32 %v319, 0.0
      %v352 = vmax.f32 %v320, 0.0
      %v353 = vmax.f32 %v321, 0.0
      %v354 = vmax.f32 %v322, 0.0
      %v355 = vmax.f32 %v323, 0.0
      %v356 = vmax.f32 %v324, 0.0
      %v357 = vmax.f32 %v325, 0.0
      %v358 = vmax.f32 %v326, 0.0
      %v359 = vmax.f32 %v327, 0.0
      %v360 = vld [vmem:[%s212] sm:$0xff]
      %v361 = vld [vmem:[%s212 + $0x8] sm:$0xff]
      %v362 = vld [vmem:[%s212 + $0x10] sm:$0xff]
      %v363 = vld [vmem:[%s212 + $0x18] sm:$0xff]
      %v364 = vld [vmem:[%s212 + $0x20] sm:$0xff]
      %v365 = vld [vmem:[%s212 + $0x28] sm:$0xff]
      %v366 = vld [vmem:[%s212 + $0x30] sm:$0xff]
      %v367 = vld [vmem:[%s212 + $0x38] sm:$0xff]
      %v368 = vld [vmem:[%s212 + $0x40] sm:$0xff]
      %v369 = vld [vmem:[%s212 + $0x48] sm:$0xff]
      %v370 = vld [vmem:[%s212 + $0x50] sm:$0xff]
      %v371 = vld [vmem:[%s212 + $0x58] sm:$0xff]
      %v372 = vld [vmem:[%s212 + $0x60] sm:$0xff]
      %v373 = vld [vmem:[%s212 + $0x68] sm:$0xff]
      %v374 = vld [vmem:[%s212 + $0x70] sm:$0xff]
      %v375 = vld [vmem:[%s212 + $0x78] sm:$0xff]
      %v376 = vld [vmem:[%s212 + $0x80] sm:$0xff]
      %v377 = vld [vmem:[%s212 + $0x88] sm:$0xff]
      %v378 = vld [vmem:[%s212 + $0x90] sm:$0xff]
      %v379 = vld [vmem:[%s212 + $0x98] sm:$0xff]
      %v380 = vld [vmem:[%s212 + $0xa0] sm:$0xff]
      %v381 = vld [vmem:[%s212 + $0xa8] sm:$0xff]
      %v382 = vld [vmem:[%s212 + $0xb0] sm:$0xff]
      %v383 = vld [vmem:[%s212 + $0xb8] sm:$0xff]
      %v384 = vld [vmem:[%s212 + $0xc0] sm:$0xff]
      %v385 = vld [vmem:[%s212 + $0xc8] sm:$0xff]
      %v386 = vld [vmem:[%s212 + $0xd0] sm:$0xff]
      %v387 = vld [vmem:[%s212 + $0xd8] sm:$0xff]
      %v388 = vld [vmem:[%s212 + $0xe0] sm:$0xff]
      %v389 = vld [vmem:[%s212 + $0xe8] sm:$0xff]
      %v390 = vld [vmem:[%s212 + $0xf0] sm:$0xff]
      %v391 = vld [vmem:[%s212 + $0xf8] sm:$0xff]
      %v392 = vadd.f32 %v328, %v360
      %v393 = vadd.f32 %v329, %v361
      %v394 = vadd.f32 %v330, %v362
      %v395 = vadd.f32 %v331, %v363
      %v396 = vadd.f32 %v332, %v364
      %v397 = vadd.f32 %v333, %v365
      %v398 = vadd.f32 %v334, %v366
      %v399 = vadd.f32 %v335, %v367
      %v400 = vadd.f32 %v336, %v368
      %v401 = vadd.f32 %v337, %v369
      %v402 = vadd.f32 %v338, %v370
      %v403 = vadd.f32 %v339, %v371
      %v404 = vadd.f32 %v340, %v372
      %v405 = vadd.f32 %v341, %v373
      %v406 = vadd.f32 %v342, %v374
      %v407 = vadd.f32 %v343, %v375
      %v408 = vadd.f32 %v344, %v376
      %v409 = vadd.f32 %v345, %v377
      %v410 = vadd.f32 %v346, %v378
      %v411 = vadd.f32 %v347, %v379
      %v412 = vadd.f32 %v348, %v380
      %v413 = vadd.f32 %v349, %v381
      %v414 = vadd.f32 %v350, %v382
      %v415 = vadd.f32 %v351, %v383
      %v416 = vadd.f32 %v352, %v384
      %v417 = vadd.f32 %v353, %v385
      %v418 = vadd.f32 %v354, %v386
      %v419 = vadd.f32 %v355, %v387
      %v420 = vadd.f32 %v356, %v388
      %v421 = vadd.f32 %v357, %v389
      %v422 = vadd.f32 %v358, %v390
      %v423 = vadd.f32 %v359, %v391
      %v424 = vmax.f32 %v392, 0.0
      %v425 = vmax.f32 %v393, 0.0
      %v426 = vmax.f32 %v394, 0.0
      %v427 = vmax.f32 %v395, 0.0
      %v428 = vmax.f32 %v396, 0.0
      %v429 = vmax.f32 %v397, 0.0
      %v430 = vmax.f32 %v398, 0.0
      %v431 = vmax.f32 %v399, 0.0
      %v432 = vmax.f32 %v400, 0.0
      %v433 = vmax.f32 %v401, 0.0
      %v434 = vmax.f32 %v402, 0.0
      %v435 = vmax.f32 %v403, 0.0
      %v436 = vmax.f32 %v404, 0.0
      %v437 = vmax.f32 %v405, 0.0
      %v438 = vmax.f32 %v406, 0.0
      %v439 = vmax.f32 %v407, 0.0
      %v440 = vmax.f32 %v408, 0.0
      %v441 = vmax.f32 %v409, 0.0
      %v442 = vmax.f32 %v410, 0.0
      %v443 = vmax.f32 %v411, 0.0
      %v444 = vmax.f32 %v412, 0.0
      %v445 = vmax.f32 %v413, 0.0
      %v446 = vmax.f32 %v414, 0.0
      %v447 = vmax.f32 %v415, 0.0
      %v448 = vmax.f32 %v416, 0.0
      %v449 = vmax.f32 %v417, 0.0
      %v450 = vmax.f32 %v418, 0.0
      %v451 = vmax.f32 %v419, 0.0
      %v452 = vmax.f32 %v420, 0.0
      %v453 = vmax.f32 %v421, 0.0
      %v454 = vmax.f32 %v422, 0.0
      %v455 = vmax.f32 %v423, 0.0
      %vm456 = vcmask 64512
      %457 = vst.msk [vmem:[%s217] sm:$0xff] %vm456, %v424
      %458 = vst.msk [vmem:[%s217 + $0x8] sm:$0xff] %vm456, %v425
      %459 = vst.msk [vmem:[%s217 + $0x10] sm:$0xff] %vm456, %v426
      %460 = vst.msk [vmem:[%s217 + $0x18] sm:$0xff] %vm456, %v427
      %461 = vst.msk [vmem:[%s217 + $0x20] sm:$0xff] %vm456, %v428
      %462 = vst.msk [vmem:[%s217 + $0x28] sm:$0xff] %vm456, %v429
      %463 = vst.msk [vmem:[%s217 + $0x30] sm:$0xff] %vm456, %v430
      %464 = vst.msk [vmem:[%s217 + $0x38] sm:$0xff] %vm456, %v431
      %465 = vst.msk [vmem:[%s217 + $0x40] sm:$0xff] %vm456, %v432
      %466 = vst.msk [vmem:[%s217 + $0x48] sm:$0xff] %vm456, %v433
      %467 = vst.msk [vmem:[%s217 + $0x50] sm:$0xff] %vm456, %v434
      %468 = vst.msk [vmem:[%s217 + $0x58] sm:$0xff] %vm456, %v435
      %469 = vst.msk [vmem:[%s217 + $0x60] sm:$0xff] %vm456, %v436
      %470 = vst.msk [vmem:[%s217 + $0x68] sm:$0xff] %vm456, %v437
      %471 = vst.msk [vmem:[%s217 + $0x70] sm:$0xff] %vm456, %v438
      %472 = vst.msk [vmem:[%s217 + $0x78] sm:$0xff] %vm456, %v439
      %473 = vst.msk [vmem:[%s217 + $0x80] sm:$0xff] %vm456, %v440
      %474 = vst.msk [vmem:[%s217 + $0x88] sm:$0xff] %vm456, %v441
      %475 = vst.msk [vmem:[%s217 + $0x90] sm:$0xff] %vm456, %v442
      %476 = vst.msk [vmem:[%s217 + $0x98] sm:$0xff] %vm456, %v443
      %477 = vst.msk [vmem:[%s217 + $0xa0] sm:$0xff] %vm456, %v444
      %478 = vst.msk [vmem:[%s217 + $0xa8] sm:$0xff] %vm456, %v445
      %479 = vst.msk [vmem:[%s217 + $0xb0] sm:$0xff] %vm456, %v446
      %480 = vst.msk [vmem:[%s217 + $0xb8] sm:$0xff] %vm456, %v447
      %481 = vst.msk [vmem:[%s217 + $0xc0] sm:$0xff] %vm456, %v448
      %482 = vst.msk [vmem:[%s217 + $0xc8] sm:$0xff] %vm456, %v449
      %483 = vst.msk [vmem:[%s217 + $0xd0] sm:$0xff] %vm456, %v450
      %484 = vst.msk [vmem:[%s217 + $0xd8] sm:$0xff] %vm456, %v451
      %485 = vst.msk [vmem:[%s217 + $0xe0] sm:$0xff] %vm456, %v452
      %486 = vst.msk [vmem:[%s217 + $0xe8] sm:$0xff] %vm456, %v453
      %487 = vst.msk [vmem:[%s217 + $0xf0] sm:$0xff] %vm456, %v454
      %488 = vst.msk [vmem:[%s217 + $0xf8] sm:$0xff] %vm456, %v455
      %p489 = scmp.lt.s32.totalorder %s15, 1
      %s490 = scalar_select %p489, %s15, 1
      %s491 = smul.addr %s490, 32
      %s492 = smul.addr %s491, 8
      %s493 = scalar_lea.vmem %s4, %s492
      // Predicated region
      $region37: #{resnet_block_pallas.7} parent=35 // pred_check
        %p494 = pneg %p127
      $region38: #{resnet_block_pallas.7} parent=35 // pred_check_branch
        %496 = sbr.rel (%p494) target = $region40
      $region39: #{resnet_block_pallas.7} parent=35 // pred_region
        _
      $region40: #{resnet_block_pallas.7} parent=35 // pred_fallthru
        _
    $region36: #{resnet_block_pallas.7} parent=5 // pred_fallthru
      _
    %p497 = scmp.le.s32.totalorder 2, %s10
    // Predicated region
    $region41: #{resnet_block_pallas.7} parent=5 // pred_check
      %p498 = pneg %p497
    $region42: #{resnet_block_pallas.7} parent=5 // pred_check_branch
      %500 = sbr.rel (%p498) target = $region44
    $region43: #{resnet_block_pallas.7} parent=5 // pred_region
      %s501 = ssub.s32 %s10, 2
      // Predicated region
      $region45: #{resnet_block_pallas.7} parent=43 // pred_check
        %p502 = pneg %p133
      $region46: #{resnet_block_pallas.7} parent=43 // pred_check_branch
        %504 = sbr.rel (%p502) target = $region48
      $region47: #{resnet_block_pallas.7} parent=43 // pred_region
        %p505 = scmp.lt.s32.totalorder %s16, 1
        %s506 = scalar_select %p505, %s16, 1
        %s507 = smul.addr %s506, 32
        %s508 = smul.addr %s507, 8
        %s509 = scalar_lea.vmem %s4, %s508
      $region48: #{resnet_block_pallas.7} parent=43 // pred_fallthru
        _
    $region44: #{resnet_block_pallas.7} parent=5 // pred_fallthru
      _
  $region6: #{resnet_block_pallas.7} parent=0 // loop_footer
    %s14 = sadd.s32 1, %s10
  $region7: #{resnet_block_pallas.7} parent=0 // loop_footer_branch
    %9 = sbr.rel target = $region3
  $region8: #{resnet_block_pallas.7} parent=0 // loop_exit
    _

// kernel: resnet_block_pallas.5
$region0: #{resnet_block_pallas.5}
  #allocation0 [shape = 'u32[]', space=smem, size = 0x4, offset = 0x4, fixed_abs, tag = 'smem constant byte address 0x4 - core index']
  #allocation1 [shape = 'u32[144,128]{1,0:T(1,128)}', space=vmem, size = 0x12000, scoped, tag = 'internal scratch']
  %s0 = inlined_call_operand.vmem [shape: f32[2,16,16,8], index: 0, kind: input, shape index: {}]
  %s1 = inlined_call_operand.vmem [shape: f32[1,8], index: 1, kind: input, shape index: {}]
  %s2 = inlined_call_operand.vmem [shape: f32[1,8], index: 2, kind: input, shape index: {}]
  %s3 = inlined_call_operand.vmem [shape: bf16[2,16,16,8], index: 3, kind: output, shape index: {}]
  %s4 = sld [smem:[#allocation0]]
  $region45: #{resnet_block_pallas.5} parent=0
    _
  %s6 = ssub.s32 1, %s4
  %s7 = scalar_select 0, %s6, %s4
  loop: start=0, step=1, limit=4
  $region2: #{resnet_block_pallas.5} parent=0 // loop_pre_header
    _
  $region3: #{resnet_block_pallas.5} parent=0 // loop_header
    %s9 = sphi 0, %s13
    %p10 = scmp.ge.s32.totalorder %s9, 4
    %s19 = sphi 0, %s21
    %s22 = sphi 0, %s19
    %s23 = sphi 0, %s22
    %s39 = sphi 0, %s23
    %s43 = sphi 0, %s43
    %s45 = sphi 0, %s43
    %s46 = sphi 0, %s45
    %s60 = sphi 0, %s46
    %s64 = sphi 0, %s64
    %s66 = sphi 0, %s64
    %s67 = sphi 0, %s66
    %s81 = sphi 0, %s67
    %s87 = sphi 0, %s89
    %s90 = sphi 0, %s87
    %s91 = sphi 0, %s90
    %s107 = sphi 0, %s91
  $region4: #{resnet_block_pallas.5} parent=0 // loop_header_branch
    %12 = sbr.rel (%p10) target = $region8
  $region5: #{resnet_block_pallas.5} parent=0 // loop_body
    %s14 = ssub.s32 %s9, 1
    %s15 = ssub.s32 %s9, 2
    %s16 = sadd.s32 %s9, 1
    %s17 = ssub.s32 %s9, %s16
    %p18 = scmp.eq.s32.totalorder %s17, 0
    %s20 = sadd.s32 %s19, 1
    %s21 = scalar_select %p18, %s19, %s20
    %p24 = pneg %p18
    %p25 = scmp.eq.s32.totalorder %s9, 1
    %p26 = por %p24, %p25
    %p27 = scmp.ne.s32.totalorder %s19, %s22
    %p28 = scmp.eq.s32.totalorder %s9, 0
    %p29 = por %p27, %p28
    %p30 = scmp.ne.s32.totalorder %s19, %s22
    %p31 = scmp.eq.s32.totalorder %s14, 1
    %p32 = por %p30, %p31
    %p33 = scmp.ne.s32.totalorder %s22, %s23
    %p34 = scmp.eq.s32.totalorder %s14, 0
    %p35 = por %p33, %p34
    %p36 = scmp.ne.s32.totalorder %s22, %s23
    %p37 = scmp.eq.s32.totalorder %s15, 1
    %p38 = por %p36, %p37
    %p40 = scmp.ne.s32.totalorder %s23, %s39
    %p41 = scmp.eq.s32.totalorder %s15, 0
    %p42 = por %p40, %p41
    %s44 = sadd.s32 %s43, 1
    %p47 = scmp.eq.s32.totalorder %s9, 1
    %p48 = scmp.ne.s32.totalorder %s43, %s45
    %p49 = scmp.eq.s32.totalorder %s9, 0
    %p50 = por %p48, %p49
    %p51 = scmp.ne.s32.totalorder %s43, %s45
    %p52 = scmp.eq.s32.totalorder %s14, 1
    %p53 = por %p51, %p52
    %p54 = scmp.ne.s32.totalorder %s45, %s46
    %p55 = scmp.eq.s32.totalorder %s14, 0
    %p56 = por %p54, %p55
    %p57 = scmp.ne.s32.totalorder %s45, %s46
    %p58 = scmp.eq.s32.totalorder %s15, 1
    %p59 = por %p57, %p58
    %p61 = scmp.ne.s32.totalorder %s46, %s60
    %p62 = scmp.eq.s32.totalorder %s15, 0
    %p63 = por %p61, %p62
    %s65 = sadd.s32 %s64, 1
    %p68 = scmp.eq.s32.totalorder %s9, 1
    %p69 = scmp.ne.s32.totalorder %s64, %s66
    %p70 = scmp.eq.s32.totalorder %s9, 0
    %p71 = por %p69, %p70
    %p72 = scmp.ne.s32.totalorder %s64, %s66
    %p73 = scmp.eq.s32.totalorder %s14, 1
    %p74 = por %p72, %p73
    %p75 = scmp.ne.s32.totalorder %s66, %s67
    %p76 = scmp.eq.s32.totalorder %s14, 0
    %p77 = por %p75, %p76
    %p78 = scmp.ne.s32.totalorder %s66, %s67
    %p79 = scmp.eq.s32.totalorder %s15, 1
    %p80 = por %p78, %p79
    %p82 = scmp.ne.s32.totalorder %s67, %s81
    %p83 = scmp.eq.s32.totalorder %s15, 0
    %p84 = por %p82, %p83
    %s85 = ssub.s32 %s9, %s16
    %p86 = scmp.eq.s32.totalorder %s85, 0
    %s88 = sadd.s32 %s87, 1
    %s89 = scalar_select %p86, %s87, %s88
    %p92 = pneg %p86
    %p93 = scmp.eq.s32.totalorder %s9, 1
    %p94 = por %p92, %p93
    %p95 = scmp.ne.s32.totalorder %s87, %s90
    %p96 = scmp.eq.s32.totalorder %s9, 0
    %p97 = por %p95, %p96
    %p98 = scmp.ne.s32.totalorder %s87, %s90
    %p99 = scmp.eq.s32.totalorder %s14, 1
    %p100 = por %p98, %p99
    %p101 = scmp.ne.s32.totalorder %s90, %s91
    %p102 = scmp.eq.s32.totalorder %s14, 0
    %p103 = por %p101, %p102
    %p104 = scmp.ne.s32.totalorder %s90, %s91
    %p105 = scmp.eq.s32.totalorder %s15, 1
    %p106 = por %p104, %p105
    %p108 = scmp.ne.s32.totalorder %s91, %s107
    %p109 = scmp.eq.s32.totalorder %s15, 0
    %p110 = por %p108, %p109
    %p111 = scmp.le.s32.totalorder 1, %s9
    %p112 = scmp.lt.s32.totalorder %s9, 3
    %p113 = pnand %p111, %p112
    %p114 = pneg %p113
    // Predicated region
    $region9: #{resnet_block_pallas.5} parent=5 // pred_check
      _
    $region10: #{resnet_block_pallas.5} parent=5 // pred_check_branch
      %116 = sbr.rel (%p113) target = $region12
    $region11: #{resnet_block_pallas.5} parent=5 // pred_region
      %s117 = ssub.s32 %s9, 1
      // Predicated region
      $region13: #{resnet_block_pallas.5} parent=11 // pred_check
        %p118 = pneg %p56
      $region14: #{resnet_block_pallas.5} parent=11 // pred_check_branch
        %120 = sbr.rel (%p118) target = $region16
      $region15: #{resnet_block_pallas.5} parent=11 // pred_region
        _
      $region16: #{resnet_block_pallas.5} parent=11 // pred_fallthru
        _
      // Predicated region
      $region17: #{resnet_block_pallas.5} parent=11 // pred_check
        %p121 = pneg %p77
      $region18: #{resnet_block_pallas.5} parent=11 // pred_check_branch
        %123 = sbr.rel (%p121) target = $region20
      $region19: #{resnet_block_pallas.5} parent=11 // pred_region
        _
      $region20: #{resnet_block_pallas.5} parent=11 // pred_fallthru
        _
    $region12: #{resnet_block_pallas.5} parent=5 // pred_fallthru
      _
    %p124 = scmp.lt.s32.totalorder %s9, 2
    // Predicated region
    $region21: #{resnet_block_pallas.5} parent=5 // pred_check
      %p125 = pneg %p124
    $region22: #{resnet_block_pallas.5} parent=5 // pred_check_branch
      %127 = sbr.rel (%p125) target = $region24
    $region23: #{resnet_block_pallas.5} parent=5 // pred_region
      // Predicated region
      $region25: #{resnet_block_pallas.5} parent=23 // pred_check
        %p128 = pneg %p29
      $region26: #{resnet_block_pallas.5} parent=23 // pred_check_branch
        %130 = sbr.rel (%p128) target = $region28
      $region27: #{resnet_block_pallas.5} parent=23 // pred_region
        %p131 = scmp.lt.s32.totalorder %s9, 1
        %s132 = scalar_select %p131, %s9, 1
        %s133 = smul.addr %s132, 32
        %s134 = smul.addr %s133, 8
        %s135 = scalar_lea.vmem %s0, %s134
      $region28: #{resnet_block_pallas.5} parent=23 // pred_fallthru
        _
    $region24: #{resnet_block_pallas.5} parent=5 // pred_fallthru
      _
    %p136 = scmp.le.s32.totalorder 1, %s9
    %p137 = scmp.lt.s32.totalorder %s9, 3
    %p138 = pnand %p136, %p137
    %p139 = pneg %p138
    // Predicated region
    $region29: #{resnet_block_pallas.5} parent=5 // pred_check
      _
    $region30: #{resnet_block_pallas.5} parent=5 // pred_check_branch
      %141 = sbr.rel (%p138) target = $region32
    $region31: #{resnet_block_pallas.5} parent=5 // pred_region
      %s142 = ssub.s32 %s9, 1
      %p143 = scmp.lt.s32.totalorder %s14, 1
      %s144 = scalar_select %p143, %s14, 1
      %s145 = smul.addr %s144, 32
      %s146 = smul.addr %s145, 8
      %s147 = scalar_lea.vmem %s0, %s146
      %p148 = pneg %p35
      %p149 = pneg %p32
      %p150 = pneg %p56
      %p151 = pneg %p53
      %p152 = pneg %p77
      %p153 = pneg %p74
      %p154 = pneg %p103
      %p155 = pneg %p100
      %p156 = scmp.lt.s32.totalorder %s14, 1
      %s157 = scalar_select %p156, %s14, 1
      %s158 = smul.addr %s157, 32
      %s159 = smul.addr %s158, 4
      %s160 = scalar_lea.vmem %s3, %s159
      %p161 = scmp.lt.s32.totalorder %s14, 1
      %s162 = scalar_select %p161, %s14, 1
      %s163 = smul.addr %s162, 32
      %s164 = smul.addr %s163, 8
      %s165 = scalar_lea.vmem %s0, %s164
      %p166 = scmp.lt.s32.totalorder %s14, 1
      %s167 = scalar_select %p166, %s14, 1
      %s168 = smul.addr %s167, 32
      %s169 = smul.addr %s168, 4
      %s170 = scalar_lea.vmem %s3, %s169
      %v171 = vld [vmem:[%s165] sm:$0xff]
      %v172 = vld [vmem:[%s165 + $0x8] sm:$0xff]
      %v173 = vld [vmem:[%s165 + $0x10] sm:$0xff]
      %v174 = vld [vmem:[%s165 + $0x18] sm:$0xff]
      %v175 = vld [vmem:[%s165 + $0x20] sm:$0xff]
      %v176 = vld [vmem:[%s165 + $0x28] sm:$0xff]
      %v177 = vld [vmem:[%s165 + $0x30] sm:$0xff]
      %v178 = vld [vmem:[%s165 + $0x38] sm:$0xff]
      %v179 = vld [vmem:[%s165 + $0x40] sm:$0xff]
      %v180 = vld [vmem:[%s165 + $0x48] sm:$0xff]
      %v181 = vld [vmem:[%s165 + $0x50] sm:$0xff]
      %v182 = vld [vmem:[%s165 + $0x58] sm:$0xff]
      %v183 = vld [vmem:[%s165 + $0x60] sm:$0xff]
      %v184 = vld [vmem:[%s165 + $0x68] sm:$0xff]
      %v185 = vld [vmem:[%s165 + $0x70] sm:$0xff]
      %v186 = vld [vmem:[%s165 + $0x78] sm:$0xff]
      %v187 = vld [vmem:[%s165 + $0x80] sm:$0xff]
      %v188 = vld [vmem:[%s165 + $0x88] sm:$0xff]
      %v189 = vld [vmem:[%s165 + $0x90] sm:$0xff]
      %v190 = vld [vmem:[%s165 + $0x98] sm:$0xff]
      %v191 = vld [vmem:[%s165 + $0xa0] sm:$0xff]
      %v192 = vld [vmem:[%s165 + $0xa8] sm:$0xff]
      %v193 = vld [vmem:[%s165 + $0xb0] sm:$0xff]
      %v194 = vld [vmem:[%s165 + $0xb8] sm:$0xff]
      %v195 = vld [vmem:[%s165 + $0xc0] sm:$0xff]
      %v196 = vld [vmem:[%s165 + $0xc8] sm:$0xff]
      %v197 = vld [vmem:[%s165 + $0xd0] sm:$0xff]
      %v198 = vld [vmem:[%s165 + $0xd8] sm:$0xff]
      %v199 = vld [vmem:[%s165 + $0xe0] sm:$0xff]
      %v200 = vld [vmem:[%s165 + $0xe8] sm:$0xff]
      %v201 = vld [vmem:[%s165 + $0xf0] sm:$0xff]
      %v202 = vld [vmem:[%s165 + $0xf8] sm:$0xff]
      %v203 = vld [vmem:[%s1] sm:$0x1]
      %v205 = vlaneseq
      %v206 = vshrl.u32 %v205, 7
      %v207 = vsub.s32 0, %v206
      %v208 = vrot.slane %v203, %v207
      %v210 = vmul.f32 %v171, %v208
      %v211 = vmul.f32 %v172, %v208
      %v212 = vmul.f32 %v173, %v208
      %v213 = vmul.f32 %v174, %v208
      %v214 = vmul.f32 %v175, %v208
      %v215 = vmul.f32 %v176, %v208
      %v216 = vmul.f32 %v177, %v208
      %v217 = vmul.f32 %v178, %v208
      %v218 = vmul.f32 %v179, %v208
      %v219 = vmul.f32 %v180, %v208
      %v220 = vmul.f32 %v181, %v208
      %v221 = vmul.f32 %v182, %v208
      %v222 = vmul.f32 %v183, %v208
      %v223 = vmul.f32 %v184, %v208
      %v224 = vmul.f32 %v185, %v208
      %v225 = vmul.f32 %v186, %v208
      %v226 = vmul.f32 %v187, %v208
      %v227 = vmul.f32 %v188, %v208
      %v228 = vmul.f32 %v189, %v208
      %v229 = vmul.f32 %v190, %v208
      %v230 = vmul.f32 %v191, %v208
      %v231 = vmul.f32 %v192, %v208
      %v232 = vmul.f32 %v193, %v208
      %v233 = vmul.f32 %v194, %v208
      %v234 = vmul.f32 %v195, %v208
      %v235 = vmul.f32 %v196, %v208
      %v236 = vmul.f32 %v197, %v208
      %v237 = vmul.f32 %v198, %v208
      %v238 = vmul.f32 %v199, %v208
      %v239 = vmul.f32 %v200, %v208
      %v240 = vmul.f32 %v201, %v208
      %v241 = vmul.f32 %v202, %v208
      %v242 = vld [vmem:[%s2] sm:$0x1]
      %v244 = vlaneseq
      %v245 = vshrl.u32 %v244, 7
      %v246 = vsub.s32 0, %v245
      %v247 = vrot.slane %v242, %v246
      %v249 = vadd.f32 %v210, %v247
      %v250 = vadd.f32 %v211, %v247
      %v251 = vadd.f32 %v212, %v247
      %v252 = vadd.f32 %v213, %v247
      %v253 = vadd.f32 %v214, %v247
      %v254 = vadd.f32 %v215, %v247
      %v255 = vadd.f32 %v216, %v247
      %v256 = vadd.f32 %v217, %v247
      %v257 = vadd.f32 %v218, %v247
      %v258 = vadd.f32 %v219, %v247
      %v259 = vadd.f32 %v220, %v247
      %v260 = vadd.f32 %v221, %v247
      %v261 = vadd.f32 %v222, %v247
      %v262 = vadd.f32 %v223, %v247
      %v263 = vadd.f32 %v224, %v247
      %v264 = vadd.f32 %v225, %v247
      %v265 = vadd.f32 %v226, %v247
      %v266 = vadd.f32 %v227, %v247
      %v267 = vadd.f32 %v228, %v247
      %v268 = vadd.f32 %v229, %v247
      %v269 = vadd.f32 %v230, %v247
      %v270 = vadd.f32 %v231, %v247
      %v271 = vadd.f32 %v232, %v247
      %v272 = vadd.f32 %v233, %v247
      %v273 = vadd.f32 %v234, %v247
      %v274 = vadd.f32 %v235, %v247
      %v275 = vadd.f32 %v236, %v247
      %v276 = vadd.f32 %v237, %v247
      %v277 = vadd.f32 %v238, %v247
      %v278 = vadd.f32 %v239, %v247
      %v279 = vadd.f32 %v240, %v247
      %v280 = vadd.f32 %v241, %v247
      %v281 = vmax.f32 %v249, 0.0
      %v282 = vmax.f32 %v250, 0.0
      %v283 = vmax.f32 %v251, 0.0
      %v284 = vmax.f32 %v252, 0.0
      %v285 = vmax.f32 %v253, 0.0
      %v286 = vmax.f32 %v254, 0.0
      %v287 = vmax.f32 %v255, 0.0
      %v288 = vmax.f32 %v256, 0.0
      %v289 = vmax.f32 %v257, 0.0
      %v290 = vmax.f32 %v258, 0.0
      %v291 = vmax.f32 %v259, 0.0
      %v292 = vmax.f32 %v260, 0.0
      %v293 = vmax.f32 %v261, 0.0
      %v294 = vmax.f32 %v262, 0.0
      %v295 = vmax.f32 %v263, 0.0
      %v296 = vmax.f32 %v264, 0.0
      %v297 = vmax.f32 %v265, 0.0
      %v298 = vmax.f32 %v266, 0.0
      %v299 = vmax.f32 %v267, 0.0
      %v300 = vmax.f32 %v268, 0.0
      %v301 = vmax.f32 %v269, 0.0
      %v302 = vmax.f32 %v270, 0.0
      %v303 = vmax.f32 %v271, 0.0
      %v304 = vmax.f32 %v272, 0.0
      %v305 = vmax.f32 %v273, 0.0
      %v306 = vmax.f32 %v274, 0.0
      %v307 = vmax.f32 %v275, 0.0
      %v308 = vmax.f32 %v276, 0.0
      %v309 = vmax.f32 %v277, 0.0
      %v310 = vmax.f32 %v278, 0.0
      %v311 = vmax.f32 %v279, 0.0
      %v312 = vmax.f32 %v280, 0.0
      %v313 = vpack.c.bf16 %v282, %v281
      %v314 = vpack.c.bf16 %v284, %v283
      %v315 = vpack.c.bf16 %v286, %v285
      %v316 = vpack.c.bf16 %v288, %v287
      %v317 = vpack.c.bf16 %v290, %v289
      %v318 = vpack.c.bf16 %v292, %v291
      %v319 = vpack.c.bf16 %v294, %v293
      %v320 = vpack.c.bf16 %v296, %v295
      %v321 = vpack.c.bf16 %v298, %v297
      %v322 = vpack.c.bf16 %v300, %v299
      %v323 = vpack.c.bf16 %v302, %v301
      %v324 = vpack.c.bf16 %v304, %v303
      %v325 = vpack.c.bf16 %v306, %v305
      %v326 = vpack.c.bf16 %v308, %v307
      %v327 = vpack.c.bf16 %v310, %v309
      %v328 = vpack.c.bf16 %v312, %v311
      %v345 = vunpack.c.l.b16 %v313
      %v346 = vunpack.c.h.b16 %v313
      %v347 = vunpack.c.l.b16 %v314
      %v348 = vunpack.c.h.b16 %v314
      %v349 = vunpack.c.l.b16 %v315
      %v350 = vunpack.c.h.b16 %v315
      %v351 = vunpack.c.l.b16 %v316
      %v352 = vunpack.c.h.b16 %v316
      %v353 = vunpack.c.l.b16 %v317
      %v354 = vunpack.c.h.b16 %v317
      %v355 = vunpack.c.l.b16 %v318
      %v356 = vunpack.c.h.b16 %v318
      %v357 = vunpack.c.l.b16 %v319
      %v358 = vunpack.c.h.b16 %v319
      %v359 = vunpack.c.l.b16 %v320
      %v360 = vunpack.c.h.b16 %v320
      %v361 = vunpack.c.l.b16 %v321
      %v362 = vunpack.c.h.b16 %v321
      %v363 = vunpack.c.l.b16 %v322
      %v364 = vunpack.c.h.b16 %v322
      %v365 = vunpack.c.l.b16 %v323
      %v366 = vunpack.c.h.b16 %v323
      %v367 = vunpack.c.l.b16 %v324
      %v368 = vunpack.c.h.b16 %v324
      %v369 = vunpack.c.l.b16 %v325
      %v370 = vunpack.c.h.b16 %v325
      %v371 = vunpack.c.l.b16 %v326
      %v372 = vunpack.c.h.b16 %v326
      %v373 = vunpack.c.l.b16 %v327
      %v374 = vunpack.c.h.b16 %v327
      %v375 = vunpack.c.l.b16 %v328
      %v376 = vunpack.c.h.b16 %v328
      %v377 = vpack.c.b16 %v345, %v345
      %v378 = vpack.c.b16 %v346, %v346
      %v379 = vpack.c.b16 %v347, %v347
      %v380 = vpack.c.b16 %v348, %v348
      %v381 = vpack.c.b16 %v349, %v349
      %v382 = vpack.c.b16 %v350, %v350
      %v383 = vpack.c.b16 %v351, %v351
      %v384 = vpack.c.b16 %v352, %v352
      %v385 = vpack.c.b16 %v353, %v353
      %v386 = vpack.c.b16 %v354, %v354
      %v387 = vpack.c.b16 %v355, %v355
      %v388 = vpack.c.b16 %v356, %v356
      %v389 = vpack.c.b16 %v357, %v357
      %v390 = vpack.c.b16 %v358, %v358
      %v391 = vpack.c.b16 %v359, %v359
      %v392 = vpack.c.b16 %v360, %v360
      %v393 = vpack.c.b16 %v361, %v361
      %v394 = vpack.c.b16 %v362, %v362
      %v395 = vpack.c.b16 %v363, %v363
      %v396 = vpack.c.b16 %v364, %v364
      %v397 = vpack.c.b16 %v365, %v365
      %v398 = vpack.c.b16 %v366, %v366
      %v399 = vpack.c.b16 %v367, %v367
      %v400 = vpack.c.b16 %v368, %v368
      %v401 = vpack.c.b16 %v369, %v369
      %v402 = vpack.c.b16 %v370, %v370
      %v403 = vpack.c.b16 %v371, %v371
      %v404 = vpack.c.b16 %v372, %v372
      %v405 = vpack.c.b16 %v373, %v373
      %v406 = vpack.c.b16 %v374, %v374
      %v407 = vpack.c.b16 %v375, %v375
      %v408 = vpack.c.b16 %v376, %v376
      %vm441 = vcmask 60416
      %442 = vst.msk [vmem:[%s170] sm:$0xf] %vm441, %v377
      %443 = vst.msk [vmem:[%s170 + $0x4] sm:$0xf] %vm441, %v378
      %444 = vst.msk [vmem:[%s170 + $0x8] sm:$0xf] %vm441, %v379
      %445 = vst.msk [vmem:[%s170 + $0xc] sm:$0xf] %vm441, %v380
      %446 = vst.msk [vmem:[%s170 + $0x10] sm:$0xf] %vm441, %v381
      %447 = vst.msk [vmem:[%s170 + $0x14] sm:$0xf] %vm441, %v382
      %448 = vst.msk [vmem:[%s170 + $0x18] sm:$0xf] %vm441, %v383
      %449 = vst.msk [vmem:[%s170 + $0x1c] sm:$0xf] %vm441, %v384
      %450 = vst.msk [vmem:[%s170 + $0x20] sm:$0xf] %vm441, %v385
      %451 = vst.msk [vmem:[%s170 + $0x24] sm:$0xf] %vm441, %v386
      %452 = vst.msk [vmem:[%s170 + $0x28] sm:$0xf] %vm441, %v387
      %453 = vst.msk [vmem:[%s170 + $0x2c] sm:$0xf] %vm441, %v388
      %454 = vst.msk [vmem:[%s170 + $0x30] sm:$0xf] %vm441, %v389
      %455 = vst.msk [vmem:[%s170 + $0x34] sm:$0xf] %vm441, %v390
      %456 = vst.msk [vmem:[%s170 + $0x38] sm:$0xf] %vm441, %v391
      %457 = vst.msk [vmem:[%s170 + $0x3c] sm:$0xf] %vm441, %v392
      %458 = vst.msk [vmem:[%s170 + $0x40] sm:$0xf] %vm441, %v393
      %459 = vst.msk [vmem:[%s170 + $0x44] sm:$0xf] %vm441, %v394
      %460 = vst.msk [vmem:[%s170 + $0x48] sm:$0xf] %vm441, %v395
      %461 = vst.msk [vmem:[%s170 + $0x4c] sm:$0xf] %vm441, %v396
      %462 = vst.msk [vmem:[%s170 + $0x50] sm:$0xf] %vm441, %v397
      %463 = vst.msk [vmem:[%s170 + $0x54] sm:$0xf] %vm441, %v398
      %464 = vst.msk [vmem:[%s170 + $0x58] sm:$0xf] %vm441, %v399
      %465 = vst.msk [vmem:[%s170 + $0x5c] sm:$0xf] %vm441, %v400
      %466 = vst.msk [vmem:[%s170 + $0x60] sm:$0xf] %vm441, %v401
      %467 = vst.msk [vmem:[%s170 + $0x64] sm:$0xf] %vm441, %v402
      %468 = vst.msk [vmem:[%s170 + $0x68] sm:$0xf] %vm441, %v403
      %469 = vst.msk [vmem:[%s170 + $0x6c] sm:$0xf] %vm441, %v404
      %470 = vst.msk [vmem:[%s170 + $0x70] sm:$0xf] %vm441, %v405
      %471 = vst.msk [vmem:[%s170 + $0x74] sm:$0xf] %vm441, %v406
      %472 = vst.msk [vmem:[%s170 + $0x78] sm:$0xf] %vm441, %v407
      %473 = vst.msk [vmem:[%s170 + $0x7c] sm:$0xf] %vm441, %v408
      %p474 = scmp.lt.s32.totalorder %s14, 1
      %s475 = scalar_select %p474, %s14, 1
      %s476 = smul.addr %s475, 32
      %s477 = smul.addr %s476, 4
      %s478 = scalar_lea.vmem %s3, %s477
      // Predicated region
      $region33: #{resnet_block_pallas.5} parent=31 // pred_check
        %p479 = pneg %p100
      $region34: #{resnet_block_pallas.5} parent=31 // pred_check_branch
        %481 = sbr.rel (%p479) target = $region36
      $region35: #{resnet_block_pallas.5} parent=31 // pred_region
        _
      $region36: #{resnet_block_pallas.5} parent=31 // pred_fallthru
        _
    $region32: #{resnet_block_pallas.5} parent=5 // pred_fallthru
      _
    %p482 = scmp.le.s32.totalorder 2, %s9
    // Predicated region
    $region37: #{resnet_block_pallas.5} parent=5 // pred_check
      %p483 = pneg %p482
    $region38: #{resnet_block_pallas.5} parent=5 // pred_check_branch
      %485 = sbr.rel (%p483) target = $region40
    $region39: #{resnet_block_pallas.5} parent=5 // pred_region
      %s486 = ssub.s32 %s9, 2
      // Predicated region
      $region41: #{resnet_block_pallas.5} parent=39 // pred_check
        %p487 = pneg %p106
      $region42: #{resnet_block_pallas.5} parent=39 // pred_check_branch
        %489 = sbr.rel (%p487) target = $region44
      $region43: #{resnet_block_pallas.5} parent=39 // pred_region
        %p490 = scmp.lt.s32.totalorder %s15, 1
        %s491 = scalar_select %p490, %s15, 1
        %s492 = smul.addr %s491, 32
        %s493 = smul.addr %s492, 4
        %s494 = scalar_lea.vmem %s3, %s493
      $region44: #{resnet_block_pallas.5} parent=39 // pred_fallthru
        _
    $region40: #{resnet_block_pallas.5} parent=5 // pred_fallthru
      _
  $region6: #{resnet_block_pallas.5} parent=0 // loop_footer
    %s13 = sadd.s32 1, %s9
  $region7: #{resnet_block_pallas.5} parent=0 // loop_footer_branch
    %8 = sbr.rel target = $region3
  $region8: #{resnet_block_pallas.5} parent=0 // loop_exit
    _

// kernel: resnet_block_pallas.4
$region0: #{resnet_block_pallas.4}
  #allocation0 [shape = 'u32[]', space=smem, size = 0x4, offset = 0x4, fixed_abs, tag = 'smem constant byte address 0x4 - core index']
  #allocation1 [shape = 'u32[144,128]{1,0:T(1,128)}', space=vmem, size = 0x12000, scoped, tag = 'internal scratch']
  #allocation2 [shape = 'f32[1,8]{1,0:T(1,128)}', space=vmem, size = 0x200, scoped, tag = 'scratch operand']
  #allocation3 [shape = 'f32[1,8]{1,0:T(1,128)}', space=vmem, size = 0x200, scoped, tag = 'scratch operand']
  %s0 = inlined_call_operand.vmem [shape: bf16[2,18,18,8], index: 0, kind: input, shape index: {}]
  %s1 = inlined_call_operand.vmem [shape: bf16[9,8,8], index: 1, kind: input, shape index: {}]
  %s2 = inlined_call_operand.vmem [shape: f32[1,8], index: 2, kind: input, shape index: {}]
  %s3 = inlined_call_operand.vmem [shape: f32[1,8], index: 3, kind: input, shape index: {}]
  %s4 = inlined_call_operand.vmem [shape: f32[2,16,16,8], index: 4, kind: output, shape index: {0}]
  %s5 = inlined_call_operand.vmem [shape: f32[1,8], index: 5, kind: output, shape index: {1}]
  %s6 = inlined_call_operand.vmem [shape: f32[1,8], index: 6, kind: output, shape index: {2}]
  %7 = xla_tuple %s4, %s5, %s6
  %s8 = sld [smem:[#allocation0]]
  $region80: #{resnet_block_pallas.4} parent=0
    _
  %s10 = ssub.s32 1, %s8
  %s11 = scalar_select 0, %s10, %s8
  loop: start=0, step=1, limit=4
  $region2: #{resnet_block_pallas.4} parent=0 // loop_pre_header
    _
  $region3: #{resnet_block_pallas.4} parent=0 // loop_header
    %s13 = sphi 0, %s17
    %p14 = scmp.ge.s32.totalorder %s13, 4
    %s20 = sphi 0, %s32
    %s21 = sphi 0, %s28
    %s22 = sphi 0, %s20
    %s23 = sphi 0, %s21
    %s24 = sphi 0, %s22
    %s25 = sphi 0, %s23
    %s35 = sphi 0, %s37
    %s38 = sphi 0, %s35
    %s39 = sphi 0, %s38
    %s55 = sphi 0, %s39
    %s59 = sphi 0, %s59
    %s61 = sphi 0, %s59
    %s62 = sphi 0, %s61
    %s76 = sphi 0, %s62
    %s80 = sphi 0, %s80
    %s82 = sphi 0, %s80
    %s83 = sphi 0, %s82
    %s97 = sphi 0, %s83
    %s101 = sphi 0, %s101
    %s103 = sphi 0, %s101
    %s104 = sphi 0, %s103
    %s118 = sphi 0, %s104
    %s126 = sphi 0, %s128
    %s129 = sphi 0, %s126
    %s130 = sphi 0, %s129
    %s146 = sphi 0, %s130
    %s150 = sphi 0, %s150
    %s152 = sphi 0, %s150
    %s153 = sphi 0, %s152
    %s167 = sphi 0, %s153
    %s171 = sphi 0, %s171
    %s173 = sphi 0, %s171
    %s174 = sphi 0, %s173
    %s188 = sphi 0, %s174
  $region4: #{resnet_block_pallas.4} parent=0 // loop_header_branch
    %16 = sbr.rel (%p14) target = $region8
  $region5: #{resnet_block_pallas.4} parent=0 // loop_body
    %s18 = ssub.s32 %s13, 1
    %s19 = ssub.s32 %s13, 2
    %s26 = sadd.s32 1, %s21
    %p27 = scmp.ge.s32.totalorder %s26, 1
    %s28 = scalar_select %p27, 0, %s26
    %s29 = sadd.s32 1, %s20
    %s30 = scalar_select %p27, %s29, %s20
    %p31 = scmp.ge.s32.totalorder %s30, 2
    %s32 = scalar_select %p31, 0, %s30
    %s33 = ssub.s32 %s20, %s32
    %p34 = scmp.eq.s32.totalorder %s33, 0
    %s36 = sadd.s32 %s35, 1
    %s37 = scalar_select %p34, %s35, %s36
    %p40 = pneg %p34
    %p41 = scmp.eq.s32.totalorder %s13, 1
    %p42 = por %p40, %p41
    %p43 = scmp.ne.s32.totalorder %s35, %s38
    %p44 = scmp.eq.s32.totalorder %s13, 0
    %p45 = por %p43, %p44
    %p46 = scmp.ne.s32.totalorder %s35, %s38
    %p47 = scmp.eq.s32.totalorder %s18, 1
    %p48 = por %p46, %p47
    %p49 = scmp.ne.s32.totalorder %s38, %s39
    %p50 = scmp.eq.s32.totalorder %s18, 0
    %p51 = por %p49, %p50
    %p52 = scmp.ne.s32.totalorder %s38, %s39
    %p53 = scmp.eq.s32.totalorder %s19, 1
    %p54 = por %p52, %p53
    %p56 = scmp.ne.s32.totalorder %s39, %s55
    %p57 = scmp.eq.s32.totalorder %s19, 0
    %p58 = por %p56, %p57
    %s60 = sadd.s32 %s59, 1
    %p63 = scmp.eq.s32.totalorder %s13, 1
    %p64 = scmp.ne.s32.totalorder %s59, %s61
    %p65 = scmp.eq.s32.totalorder %s13, 0
    %p66 = por %p64, %p65
    %p67 = scmp.ne.s32.totalorder %s59, %s61
    %p68 = scmp.eq.s32.totalorder %s18, 1
    %p69 = por %p67, %p68
    %p70 = scmp.ne.s32.totalorder %s61, %s62
    %p71 = scmp.eq.s32.totalorder %s18, 0
    %p72 = por %p70, %p71
    %p73 = scmp.ne.s32.totalorder %s61, %s62
    %p74 = scmp.eq.s32.totalorder %s19, 1
    %p75 = por %p73, %p74
    %p77 = scmp.ne.s32.totalorder %s62, %s76
    %p78 = scmp.eq.s32.totalorder %s19, 0
    %p79 = por %p77, %p78
    %s81 = sadd.s32 %s80, 1
    %p84 = scmp.eq.s32.totalorder %s13, 1
    %p85 = scmp.ne.s32.totalorder %s80, %s82
    %p86 = scmp.eq.s32.totalorder %s13, 0
    %p87 = por %p85, %p86
    %p88 = scmp.ne.s32.totalorder %s80, %s82
    %p89 = scmp.eq.s32.totalorder %s18, 1
    %p90 = por %p88, %p89
    %p91 = scmp.ne.s32.totalorder %s82, %s83
    %p92 = scmp.eq.s32.totalorder %s18, 0
    %p93 = por %p91, %p92
    %p94 = scmp.ne.s32.totalorder %s82, %s83
    %p95 = scmp.eq.s32.totalorder %s19, 1
    %p96 = por %p94, %p95
    %p98 = scmp.ne.s32.totalorder %s83, %s97
    %p99 = scmp.eq.s32.totalorder %s19, 0
    %p100 = por %p98, %p99
    %s102 = sadd.s32 %s101, 1
    %p105 = scmp.eq.s32.totalorder %s13, 1
    %p106 = scmp.ne.s32.totalorder %s101, %s103
    %p107 = scmp.eq.s32.totalorder %s13, 0
    %p108 = por %p106, %p107
    %p109 = scmp.ne.s32.totalorder %s101, %s103
    %p110 = scmp.eq.s32.totalorder %s18, 1
    %p111 = por %p109, %p110
    %p112 = scmp.ne.s32.totalorder %s103, %s104
    %p113 = scmp.eq.s32.totalorder %s18, 0
    %p114 = por %p112, %p113
    %p115 = scmp.ne.s32.totalorder %s103, %s104
    %p116 = scmp.eq.s32.totalorder %s19, 1
    %p117 = por %p115, %p116
    %p119 = scmp.ne.s32.totalorder %s104, %s118
    %p120 = scmp.eq.s32.totalorder %s19, 0
    %p121 = por %p119, %p120
    %s122 = ssub.s32 %s20, %s32
    %s123 = ssub.s32 %s21, %s28
    %s124 = sor.u32 %s122, %s123
    %p125 = scmp.eq.s32.totalorder %s124, 0
    %s127 = sadd.s32 %s126, 1
    %s128 = scalar_select %p125, %s126, %s127
    %p131 = pneg %p125
    %p132 = scmp.eq.s32.totalorder %s13, 1
    %p133 = por %p131, %p132
    %p134 = scmp.ne.s32.totalorder %s126, %s129
    %p135 = scmp.eq.s32.totalorder %s13, 0
    %p136 = por %p134, %p135
    %p137 = scmp.ne.s32.totalorder %s126, %s129
    %p138 = scmp.eq.s32.totalorder %s18, 1
    %p139 = por %p137, %p138
    %p140 = scmp.ne.s32.totalorder %s129, %s130
    %p141 = scmp.eq.s32.totalorder %s18, 0
    %p142 = por %p140, %p141
    %p143 = scmp.ne.s32.totalorder %s129, %s130
    %p144 = scmp.eq.s32.totalorder %s19, 1
    %p145 = por %p143, %p144
    %p147 = scmp.ne.s32.totalorder %s130, %s146
    %p148 = scmp.eq.s32.totalorder %s19, 0
    %p149 = por %p147, %p148
    %s151 = sadd.s32 %s150, 1
    %p154 = scmp.eq.s32.totalorder %s13, 1
    %p155 = scmp.ne.s32.totalorder %s150, %s152
    %p156 = scmp.eq.s32.totalorder %s13, 0
    %p157 = por %p155, %p156
    %p158 = scmp.ne.s32.totalorder %s150, %s152
    %p159 = scmp.eq.s32.totalorder %s18, 1
    %p160 = por %p158, %p159
    %p161 = scmp.ne.s32.totalorder %s152, %s153
    %p162 = scmp.eq.s32.totalorder %s18, 0
    %p163 = por %p161, %p162
    %p164 = scmp.ne.s32.totalorder %s152, %s153
    %p165 = scmp.eq.s32.totalorder %s19, 1
    %p166 = por %p164, %p165
    %p168 = scmp.ne.s32.totalorder %s153, %s167
    %p169 = scmp.eq.s32.totalorder %s19, 0
    %p170 = por %p168, %p169
    %s172 = sadd.s32 %s171, 1
    %p175 = scmp.eq.s32.totalorder %s13, 1
    %p176 = scmp.ne.s32.totalorder %s171, %s173
    %p177 = scmp.eq.s32.totalorder %s13, 0
    %p178 = por %p176, %p177
    %p179 = scmp.ne.s32.totalorder %s171, %s173
    %p180 = scmp.eq.s32.totalorder %s18, 1
    %p181 = por %p179, %p180
    %p182 = scmp.ne.s32.totalorder %s173, %s174
    %p183 = scmp.eq.s32.totalorder %s18, 0
    %p184 = por %p182, %p183
    %p185 = scmp.ne.s32.totalorder %s173, %s174
    %p186 = scmp.eq.s32.totalorder %s19, 1
    %p187 = por %p185, %p186
    %p189 = scmp.ne.s32.totalorder %s174, %s188
    %p190 = scmp.eq.s32.totalorder %s19, 0
    %p191 = por %p189, %p190
    %p192 = scmp.le.s32.totalorder 1, %s13
    %p193 = scmp.lt.s32.totalorder %s13, 3
    %p194 = pnand %p192, %p193
    %p195 = pneg %p194
    // Predicated region
    $region9: #{resnet_block_pallas.4} parent=5 // pred_check
      _
    $region10: #{resnet_block_pallas.4} parent=5 // pred_check_branch
      %197 = sbr.rel (%p194) target = $region12
    $region11: #{resnet_block_pallas.4} parent=5 // pred_region
      %s198 = ssub.s32 %s13, 1
      // Predicated region
      $region13: #{resnet_block_pallas.4} parent=11 // pred_check
        %p199 = pneg %p72
      $region14: #{resnet_block_pallas.4} parent=11 // pred_check_branch
        %201 = sbr.rel (%p199) target = $region16
      $region15: #{resnet_block_pallas.4} parent=11 // pred_region
        _
      $region16: #{resnet_block_pallas.4} parent=11 // pred_fallthru
        _
      // Predicated region
      $region17: #{resnet_block_pallas.4} parent=11 // pred_check
        %p202 = pneg %p93
      $region18: #{resnet_block_pallas.4} parent=11 // pred_check_branch
        %204 = sbr.rel (%p202) target = $region20
      $region19: #{resnet_block_pallas.4} parent=11 // pred_region
        _
      $region20: #{resnet_block_pallas.4} parent=11 // pred_fallthru
        _
      // Predicated region
      $region21: #{resnet_block_pallas.4} parent=11 // pred_check
        %p205 = pneg %p114
      $region22: #{resnet_block_pallas.4} parent=11 // pred_check_branch
        %207 = sbr.rel (%p205) target = $region24
      $region23: #{resnet_block_pallas.4} parent=11 // pred_region
        _
      $region24: #{resnet_block_pallas.4} parent=11 // pred_fallthru
        _
    $region12: #{resnet_block_pallas.4} parent=5 // pred_fallthru
      _
    %p208 = scmp.lt.s32.totalorder %s13, 2
    // Predicated region
    $region25: #{resnet_block_pallas.4} parent=5 // pred_check
      %p209 = pneg %p208
    $region26: #{resnet_block_pallas.4} parent=5 // pred_check_branch
      %211 = sbr.rel (%p209) target = $region28
    $region27: #{resnet_block_pallas.4} parent=5 // pred_region
      // Predicated region
      $region29: #{resnet_block_pallas.4} parent=27 // pred_check
        %p212 = pneg %p45
      $region30: #{resnet_block_pallas.4} parent=27 // pred_check_branch
        %214 = sbr.rel (%p212) target = $region32
      $region31: #{resnet_block_pallas.4} parent=27 // pred_region
        %p215 = scmp.lt.s32.totalorder %s20, 1
        %s216 = scalar_select %p215, %s20, 1
        %s217 = smul.addr %s216, 54
        %s218 = smul.addr %s217, 4
        %s219 = scalar_lea.vmem %s0, %s218
      $region32: #{resnet_block_pallas.4} parent=27 // pred_fallthru
        _
    $region28: #{resnet_block_pallas.4} parent=5 // pred_fallthru
      _
    %p220 = scmp.le.s32.totalorder 1, %s13
    %p221 = scmp.lt.s32.totalorder %s13, 3
    %p222 = pnand %p220, %p221
    %p223 = pneg %p222
    // Predicated region
    $region33: #{resnet_block_pallas.4} parent=5 // pred_check
      _
    $region34: #{resnet_block_pallas.4} parent=5 // pred_check_branch
      %225 = sbr.rel (%p222) target = $region36
    $region35: #{resnet_block_pallas.4} parent=5 // pred_region
      %s226 = ssub.s32 %s13, 1
      %p227 = scmp.lt.s32.totalorder %s22, 1
      %s228 = scalar_select %p227, %s22, 1
      %s229 = smul.addr %s228, 54
      %s230 = smul.addr %s229, 4
      %s231 = scalar_lea.vmem %s0, %s230
      %p232 = pneg %p51
      %p233 = pneg %p48
      %p234 = pneg %p72
      %p235 = pneg %p69
      %p236 = pneg %p93
      %p237 = pneg %p90
      %p238 = pneg %p114
      %p239 = pneg %p111
      %p240 = pneg %p142
      %p241 = pneg %p139
      %s242 = smul.u32 16, %s23
      %p243 = scmp.lt.s32.totalorder %s22, 1
      %s244 = scalar_select %p243, %s22, 1
      %p245 = scmp.lt.s32.totalorder %s242, 15
      %s246 = scalar_select %p245, %s242, 15
      %s247 = smul.addr %s246, 2
      %s248 = smul.addr %s244, 32
      %s249 = sadd.s32 %s247, %s248
      %s250 = smul.addr %s249, 8
      %s251 = scalar_lea.vmem %s4, %s250
      %p252 = pneg %p163
      %p253 = pneg %p160
      %p254 = pneg %p184
      %p255 = pneg %p181
      %p256 = scmp.lt.s32.totalorder %s22, 1
      %s257 = scalar_select %p256, %s22, 1
      %s258 = smul.addr %s257, 54
      %s259 = smul.addr %s258, 4
      %s260 = scalar_lea.vmem %s0, %s259
      %s261 = smul.u32 16, %s23
      %p262 = scmp.lt.s32.totalorder %s22, 1
      %s263 = scalar_select %p262, %s22, 1
      %p264 = scmp.lt.s32.totalorder %s261, 15
      %s265 = scalar_select %p264, %s261, 15
      %s266 = smul.addr %s265, 2
      %s267 = smul.addr %s263, 32
      %s268 = sadd.s32 %s266, %s267
      %s269 = smul.addr %s268, 8
      %s270 = scalar_lea.vmem %s4, %s269
      %s271 = smul.u32 16, %s23
      %s273 = sadd.s32 %s22, %s23
      %s274 = smul.u32 %s23, 16
      %p275 = scmp.eq.s32.totalorder %s273, 0
      // Predicated region
      $region37: #{resnet_block_pallas.4} parent=35 // pred_check
        %p276 = pneg %p275
      $region38: #{resnet_block_pallas.4} parent=35 // pred_check_branch
        %278 = sbr.rel (%p276) target = $region40
      $region39: #{resnet_block_pallas.4} parent=35 // pred_region
        %vm279 = vcmask 57344
        %280 = vst.msk [vmem:[#allocation2] sm:$0x1] %vm279, 0.0
        %281 = vst.msk [vmem:[#allocation3] sm:$0x1] %vm279, 0.0
      $region40: #{resnet_block_pallas.4} parent=35 // pred_fallthru
        _
      loop: start=0, step=1, limit=16
      $region41: #{resnet_block_pallas.4} parent=35 // loop_pre_header
        _
      $region42: #{resnet_block_pallas.4} parent=35 // loop_header
        %s283 = sphi 0, %s287
        %p284 = scmp.ge.s32.totalorder %s283, 16
      $region43: #{resnet_block_pallas.4} parent=35 // loop_header_branch
        %286 = sbr.rel (%p284) target = $region47
      $region44: #{resnet_block_pallas.4} parent=35 // loop_body
        %s288 = sadd.s32 %s274, %s283
        %s289 = smul.u32 %s288, 3
        %s290 = smul.addr %s289, 4
        %s291 = scalar_lea.vmem %s260, %s290
        %v292 = vld [vmem:[%s291] sm:$0xf]
        %v293 = vld [vmem:[%s291 + $0x4] sm:$0xf]
        %v294 = vld [vmem:[%s291 + $0x8] sm:$0x1]
        %v295 = vld [vmem:[%s1] sm:$0xf]
        %s296 = scalar_lea.vmem %s1, 4
        %v297 = vld [vmem:[%s296] sm:$0xf]
        %v301 = vunpack.c.l.b16 %v292
        %v302 = vunpack.c.l.b16 %v293
        %v303 = vunpack.c.l.b16 %v294
        %v304 = vpack.c.b16 %v302, %v301
        %v305 = vpack.c.b16 %v303, %v303
        %vm306 = vsmask.f32 7424
        %v308 = vshrl.u32 %v304, 16
        %v310 = vshll.u32 %v304, 16
        %v312 = vrot.slane %v310, 1
        %v313 = vor.u32 %v308, %v312
        %v315 = vshll.u32 %v305, 16
        %v317 = vrot.slane %v315, 1
        %v318 = vsel %vm306, %v313, %v317
        %vm319 = vcmask 64512
        %v321 = vsel %vm319, %v318, 0
        %vm323 = vcmask 1043456
        %v325 = vsel %vm323, %v297, 0
        %327 = vmatprep.subr.bf16.mxu0 0
        %328 = vmatpush1.bf16.msra.mxu0 0
        %329 = vmatprep.subr.bf16.mxu0 0
        %330 = vmatpush1.bf16.msra.mxu0 0
        %331 = vmatprep.subr.bf16.mxu0 0
        %332 = vmatpush1.bf16.msra.mxu0 0
        %333 = vmatprep.subr.bf16.mxu0 0
        %334 = vmatpush1.bf16.msra.mxu0 0
        %335 = vmatprep.subr.bf16.mxu0 0
        %336 = vmatpush1.bf16.msra.mxu0 0
        %337 = vmatprep.subr.bf16.mxu0 0
        %338 = vmatpush1.bf16.msra.mxu0 0
        %339 = vmatprep.subr.bf16.mxu0 0
        %340 = vmatpush1.bf16.msra.mxu0 0
        %341 = vmatprep.subr.bf16.mxu0 0
        %342 = vmatpush1.bf16.msra.mxu0 %v325
        %343 = vmatprep.subr.bf16.mxu0 0
        %344 = vmatpush2.bf16.msra.mxu0 0
        %345 = vmatprep.subr.bf16.mxu0 0
        %346 = vmatpush2.bf16.msra.mxu0 0
        %347 = vmatprep.subr.bf16.mxu0 0
        %348 = vmatpush2.bf16.msra.mxu0 0
        %349 = vmatprep.subr.bf16.mxu0 0
        %350 = vmatpush2.bf16.msra.mxu0 0
        %351 = vmatprep.subr.bf16.mxu0 0
        %352 = vmatpush2.bf16.msra.mxu0 0
        %353 = vmatprep.subr.bf16.mxu0 0
        %354 = vmatpush2.bf16.msra.mxu0 0
        %355 = vmatprep.subr.bf16.mxu0 0
        %356 = vmatpush2.bf16.msra.mxu0 0
        %357 = vmatprep.subr.bf16.mxu0 0
        %358 = vmatpush2.bf16.msra.mxu0 0
        %359 = vmatprep.mubr.bf16.mxu0 0
        %360 = vmatmul.mubr.bf16.gmra.mxu0 %v321
        %v361 = vpop.f32.mrf.mxu0
        %v362 = vadd.f32 0.0, %v361
        %v363 = vpop.f32.mrf.mxu0
        %v364 = vpop.f32.mrf.mxu0
        %v365 = vadd.f32 0.0, %v364
        %v366 = vpop.f32.mrf.mxu0
        %367 = vdwg.mxu0
        %v368 = vsel %vm319, %v304, 0
        %v371 = vsel %vm323, %v295, 0
        %373 = vmatprep.subr.bf16.mxu0 0
        %374 = vmatpush1.bf16.msra.mxu0 0
        %375 = vmatprep.subr.bf16.mxu0 0
        %376 = vmatpush1.bf16.msra.mxu0 0
        %377 = vmatprep.subr.bf16.mxu0 0
        %378 = vmatpush1.bf16.msra.mxu0 0
        %379 = vmatprep.subr.bf16.mxu0 0
        %380 = vmatpush1.bf16.msra.mxu0 0
        %381 = vmatprep.subr.bf16.mxu0 0
        %382 = vmatpush1.bf16.msra.mxu0 0
        %383 = vmatprep.subr.bf16.mxu0 0
        %384 = vmatpush1.bf16.msra.mxu0 0
        %385 = vmatprep.subr.bf16.mxu0 0
        %386 = vmatpush1.bf16.msra.mxu0 0
        %387 = vmatprep.subr.bf16.mxu0 0
        %388 = vmatpush1.bf16.msra.mxu0 %v371
        %389 = vmatprep.subr.bf16.mxu0 0
        %390 = vmatpush2.bf16.msra.mxu0 0
        %391 = vmatprep.subr.bf16.mxu0 0
        %392 = vmatpush2.bf16.msra.mxu0 0
        %393 = vmatprep.subr.bf16.mxu0 0
        %394 = vmatpush2.bf16.msra.mxu0 0
        %395 = vmatprep.subr.bf16.mxu0 0
        %396 = vmatpush2.bf16.msra.mxu0 0
        %397 = vmatprep.subr.bf16.mxu0 0
        %398 = vmatpush2.bf16.msra.mxu0 0
        %399 = vmatprep.subr.bf16.mxu0 0
        %400 = vmatpush2.bf16.msra.mxu0 0
        %401 = vmatprep.subr.bf16.mxu0 0
        %402 = vmatpush2.bf16.msra.mxu0 0
        %403 = vmatprep.subr.bf16.mxu0 0
        %404 = vmatpush2.bf16.msra.mxu0 0
        %405 = vmatprep.mubr.bf16.mxu0 0
        %406 = vmatmul.mubr.bf16.gmra.mxu0 %v368
        %v407 = vpop.f32.mrf.mxu0
        %v408 = vadd.f32 %v362, %v407
        %v409 = vpop.f32.mrf.mxu0
        %v410 = vpop.f32.mrf.mxu0
        %v411 = vadd.f32 %v365, %v410
        %v412 = vpop.f32.mrf.mxu0
        %413 = vdwg.mxu0
        %s414 = scalar_lea.vmem %s1, 8
        %v415 = vld [vmem:[%s414] sm:$0xf]
        %vm416 = vcmask 1046528
        %v417 = vrot.slane %v304, 1
        %v418 = vrot.slane %v305, 1
        %v419 = vsel %vm416, %v417, %v418
        %v421 = vsel %vm319, %v419, 0
        %v424 = vsel %vm323, %v415, 0
        %426 = vmatprep.subr.bf16.mxu0 0
        %427 = vmatpush1.bf16.msra.mxu0 0
        %428 = vmatprep.subr.bf16.mxu0 0
        %429 = vmatpush1.bf16.msra.mxu0 0
        %430 = vmatprep.subr.bf16.mxu0 0
        %431 = vmatpush1.bf16.msra.mxu0 0
        %432 = vmatprep.subr.bf16.mxu0 0
        %433 = vmatpush1.bf16.msra.mxu0 0
        %434 = vmatprep.subr.bf16.mxu0 0
        %435 = vmatpush1.bf16.msra.mxu0 0
        %436 = vmatprep.subr.bf16.mxu0 0
        %437 = vmatpush1.bf16.msra.mxu0 0
        %438 = vmatprep.subr.bf16.mxu0 0
        %439 = vmatpush1.bf16.msra.mxu0 0
        %440 = vmatprep.subr.bf16.mxu0 0
        %441 = vmatpush1.bf16.msra.mxu0 %v424
        %442 = vmatprep.subr.bf16.mxu0 0
        %443 = vmatpush2.bf16.msra.mxu0 0
        %444 = vmatprep.subr.bf16.mxu0 0
        %445 = vmatpush2.bf16.msra.mxu0 0
        %446 = vmatprep.subr.bf16.mxu0 0
        %447 = vmatpush2.bf16.msra.mxu0 0
        %448 = vmatprep.subr.bf16.mxu0 0
        %449 = vmatpush2.bf16.msra.mxu0 0
        %450 = vmatprep.subr.bf16.mxu0 0
        %451 = vmatpush2.bf16.msra.mxu0 0
        %452 = vmatprep.subr.bf16.mxu0 0
        %453 = vmatpush2.bf16.msra.mxu0 0
        %454 = vmatprep.subr.bf16.mxu0 0
        %455 = vmatpush2.bf16.msra.mxu0 0
        %456 = vmatprep.subr.bf16.mxu0 0
        %457 = vmatpush2.bf16.msra.mxu0 0
        %458 = vmatprep.mubr.bf16.mxu0 0
        %459 = vmatmul.mubr.bf16.gmra.mxu0 %v421
        %v460 = vpop.f32.mrf.mxu0
        %v461 = vadd.f32 0.0, %v460
        %v462 = vpop.f32.mrf.mxu0
        %v463 = vpop.f32.mrf.mxu0
        %v464 = vadd.f32 0.0, %v463
        %v465 = vpop.f32.mrf.mxu0
        %466 = vdwg.mxu0
        %v467 = vadd.f32 %v408, %v461
        %v468 = vadd.f32 %v411, %v464
        %s469 = sadd.s32 %s288, 1
        %s470 = smul.u32 %s469, 3
        %s471 = smul.addr %s470, 4
        %s472 = scalar_lea.vmem %s260, %s471
        %v473 = vld [vmem:[%s472] sm:$0xf]
        %v474 = vld [vmem:[%s472 + $0x4] sm:$0xf]
        %v475 = vld [vmem:[%s472 + $0x8] sm:$0x1]
        %s476 = scalar_lea.vmem %s1, 12
        %v477 = vld [vmem:[%s476] sm:$0xf]
        %v480 = vunpack.c.l.b16 %v473
        %v481 = vunpack.c.l.b16 %v474
        %v482 = vpack.c.b16 %v481, %v480
        %v484 = vsel %vm319, %v482, 0
        %v487 = vsel %vm323, %v477, 0
        %489 = vmatprep.subr.bf16.mxu0 0
        %490 = vmatpush1.bf16.msra.mxu0 0
        %491 = vmatprep.subr.bf16.mxu0 0
        %492 = vmatpush1.bf16.msra.mxu0 0
        %493 = vmatprep.subr.bf16.mxu0 0
        %494 = vmatpush1.bf16.msra.mxu0 0
        %495 = vmatprep.subr.bf16.mxu0 0
        %496 = vmatpush1.bf16.msra.mxu0 0
        %497 = vmatprep.subr.bf16.mxu0 0
        %498 = vmatpush1.bf16.msra.mxu0 0
        %499 = vmatprep.subr.bf16.mxu0 0
        %500 = vmatpush1.bf16.msra.mxu0 0
        %501 = vmatprep.subr.bf16.mxu0 0
        %502 = vmatpush1.bf16.msra.mxu0 0
        %503 = vmatprep.subr.bf16.mxu0 0
        %504 = vmatpush1.bf16.msra.mxu0 %v487
        %505 = vmatprep.subr.bf16.mxu0 0
        %506 = vmatpush2.bf16.msra.mxu0 0
        %507 = vmatprep.subr.bf16.mxu0 0
        %508 = vmatpush2.bf16.msra.mxu0 0
        %509 = vmatprep.subr.bf16.mxu0 0
        %510 = vmatpush2.bf16.msra.mxu0 0
        %511 = vmatprep.subr.bf16.mxu0 0
        %512 = vmatpush2.bf16.msra.mxu0 0
        %513 = vmatprep.subr.bf16.mxu0 0
        %514 = vmatpush2.bf16.msra.mxu0 0
        %515 = vmatprep.subr.bf16.mxu0 0
        %516 = vmatpush2.bf16.msra.mxu0 0
        %517 = vmatprep.subr.bf16.mxu0 0
        %518 = vmatpush2.bf16.msra.mxu0 0
        %519 = vmatprep.subr.bf16.mxu0 0
        %520 = vmatpush2.bf16.msra.mxu0 0
        %521 = vmatprep.mubr.bf16.mxu0 0
        %522 = vmatmul.mubr.bf16.gmra.mxu0 %v484
        %v523 = vpop.f32.mrf.mxu0
        %v524 = vadd.f32 0.0, %v523
        %v525 = vpop.f32.mrf.mxu0
        %v526 = vpop.f32.mrf.mxu0
        %v527 = vadd.f32 0.0, %v526
        %v528 = vpop.f32.mrf.mxu0
        %529 = vdwg.mxu0
        %v530 = vadd.f32 %v467, %v524
        %v531 = vadd.f32 %v468, %v527
        %s532 = scalar_lea.vmem %s1, 16
        %v533 = vld [vmem:[%s532] sm:$0xf]
        %v535 = vunpack.c.l.b16 %v475
        %v536 = vpack.c.b16 %v535, %v535
        %v537 = vshrl.u32 %v482, 16
        %v539 = vshll.u32 %v482, 16
        %v541 = vrot.slane %v539, 1
        %v542 = vor.u32 %v537, %v541
        %v544 = vshll.u32 %v536, 16
        %v546 = vrot.slane %v544, 1
        %v547 = vsel %vm306, %v542, %v546
        %v549 = vsel %vm319, %v547, 0
        %v552 = vsel %vm323, %v533, 0
        %554 = vmatprep.subr.bf16.mxu0 0
        %555 = vmatpush1.bf16.msra.mxu0 0
        %556 = vmatprep.subr.bf16.mxu0 0
        %557 = vmatpush1.bf16.msra.mxu0 0
        %558 = vmatprep.subr.bf16.mxu0 0
        %559 = vmatpush1.bf16.msra.mxu0 0
        %560 = vmatprep.subr.bf16.mxu0 0
        %561 = vmatpush1.bf16.msra.mxu0 0
        %562 = vmatprep.subr.bf16.mxu0 0
        %563 = vmatpush1.bf16.msra.mxu0 0
        %564 = vmatprep.subr.bf16.mxu0 0
        %565 = vmatpush1.bf16.msra.mxu0 0
        %566 = vmatprep.subr.bf16.mxu0 0
        %567 = vmatpush1.bf16.msra.mxu0 0
        %568 = vmatprep.subr.bf16.mxu0 0
        %569 = vmatpush1.bf16.msra.mxu0 %v552
        %570 = vmatprep.subr.bf16.mxu0 0
        %571 = vmatpush2.bf16.msra.mxu0 0
        %572 = vmatprep.subr.bf16.mxu0 0
        %573 = vmatpush2.bf16.msra.mxu0 0
        %574 = vmatprep.subr.bf16.mxu0 0
        %575 = vmatpush2.bf16.msra.mxu0 0
        %576 = vmatprep.subr.bf16.mxu0 0
        %577 = vmatpush2.bf16.msra.mxu0 0
        %578 = vmatprep.subr.bf16.mxu0 0
        %579 = vmatpush2.bf16.msra.mxu0 0
        %580 = vmatprep.subr.bf16.mxu0 0
        %581 = vmatpush2.bf16.msra.mxu0 0
        %582 = vmatprep.subr.bf16.mxu0 0
        %583 = vmatpush2.bf16.msra.mxu0 0
        %584 = vmatprep.subr.bf16.mxu0 0
        %585 = vmatpush2.bf16.msra.mxu0 0
        %586 = vmatprep.mubr.bf16.mxu0 0
        %587 = vmatmul.mubr.bf16.gmra.mxu0 %v549
        %v588 = vpop.f32.mrf.mxu0
        %v589 = vadd.f32 0.0, %v588
        %v590 = vpop.f32.mrf.mxu0
        %v591 = vpop.f32.mrf.mxu0
        %v592 = vadd.f32 0.0, %v591
        %v593 = vpop.f32.mrf.mxu0
        %594 = vdwg.mxu0
        %v595 = vadd.f32 %v530, %v589
        %v596 = vadd.f32 %v531, %v592
        %s597 = scalar_lea.vmem %s1, 20
        %v598 = vld [vmem:[%s597] sm:$0xf]
        %v599 = vrot.slane %v482, 1
        %v600 = vrot.slane %v536, 1
        %v601 = vsel %vm416, %v599, %v600
        %v603 = vsel %vm319, %v601, 0
        %v606 = vsel %vm323, %v598, 0
        %608 = vmatprep.subr.bf16.mxu0 0
        %609 = vmatpush1.bf16.msra.mxu0 0
        %610 = vmatprep.subr.bf16.mxu0 0
        %611 = vmatpush1.bf16.msra.mxu0 0
        %612 = vmatprep.subr.bf16.mxu0 0
        %613 = vmatpush1.bf16.msra.mxu0 0
        %614 = vmatprep.subr.bf16.mxu0 0
        %615 = vmatpush1.bf16.msra.mxu0 0
        %616 = vmatprep.subr.bf16.mxu0 0
        %617 = vmatpush1.bf16.msra.mxu0 0
        %618 = vmatprep.subr.bf16.mxu0 0
        %619 = vmatpush1.bf16.msra.mxu0 0
        %620 = vmatprep.subr.bf16.mxu0 0
        %621 = vmatpush1.bf16.msra.mxu0 0
        %622 = vmatprep.subr.bf16.mxu0 0
        %623 = vmatpush1.bf16.msra.mxu0 %v606
        %624 = vmatprep.subr.bf16.mxu0 0
        %625 = vmatpush2.bf16.msra.mxu0 0
        %626 = vmatprep.subr.bf16.mxu0 0
        %627 = vmatpush2.bf16.msra.mxu0 0
        %628 = vmatprep.subr.bf16.mxu0 0
        %629 = vmatpush2.bf16.msra.mxu0 0
        %630 = vmatprep.subr.bf16.mxu0 0
        %631 = vmatpush2.bf16.msra.mxu0 0
        %632 = vmatprep.subr.bf16.mxu0 0
        %633 = vmatpush2.bf16.msra.mxu0 0
        %634 = vmatprep.subr.bf16.mxu0 0
        %635 = vmatpush2.bf16.msra.mxu0 0
        %636 = vmatprep.subr.bf16.mxu0 0
        %637 = vmatpush2.bf16.msra.mxu0 0
        %638 = vmatprep.subr.bf16.mxu0 0
        %639 = vmatpush2.bf16.msra.mxu0 0
        %640 = vmatprep.mubr.bf16.mxu0 0
        %641 = vmatmul.mubr.bf16.gmra.mxu0 %v603
        %v642 = vpop.f32.mrf.mxu0
        %v643 = vadd.f32 0.0, %v642
        %v644 = vpop.f32.mrf.mxu0
        %v645 = vpop.f32.mrf.mxu0
        %v646 = vadd.f32 0.0, %v645
        %v647 = vpop.f32.mrf.mxu0
        %648 = vdwg.mxu0
        %v649 = vadd.f32 %v595, %v643
        %v650 = vadd.f32 %v596, %v646
        %s651 = sadd.s32 %s288, 2
        %s652 = smul.u32 %s651, 3
        %s653 = smul.addr %s652, 4
        %s654 = scalar_lea.vmem %s260, %s653
        %v655 = vld [vmem:[%s654] sm:$0xf]
        %v656 = vld [vmem:[%s654 + $0x4] sm:$0xf]
        %v657 = vld [vmem:[%s654 + $0x8] sm:$0x1]
        %s658 = scalar_lea.vmem %s1, 24
        %v659 = vld [vmem:[%s658] sm:$0xf]
        %v662 = vunpack.c.l.b16 %v655
        %v663 = vunpack.c.l.b16 %v656
        %v664 = vpack.c.b16 %v663, %v662
        %v666 = vsel %vm319, %v664, 0
        %v669 = vsel %vm323, %v659, 0
        %671 = vmatprep.subr.bf16.mxu0 0
        %672 = vmatpush1.bf16.msra.mxu0 0
        %673 = vmatprep.subr.bf16.mxu0 0
        %674 = vmatpush1.bf16.msra.mxu0 0
        %675 = vmatprep.subr.bf16.mxu0 0
        %676 = vmatpush1.bf16.msra.mxu0 0
        %677 = vmatprep.subr.bf16.mxu0 0
        %678 = vmatpush1.bf16.msra.mxu0 0
        %679 = vmatprep.subr.bf16.mxu0 0
        %680 = vmatpush1.bf16.msra.mxu0 0
        %681 = vmatprep.subr.bf16.mxu0 0
        %682 = vmatpush1.bf16.msra.mxu0 0
        %683 = vmatprep.subr.bf16.mxu0 0
        %684 = vmatpush1.bf16.msra.mxu0 0
        %685 = vmatprep.subr.bf16.mxu0 0
        %686 = vmatpush1.bf16.msra.mxu0 %v669
        %687 = vmatprep.subr.bf16.mxu0 0
        %688 = vmatpush2.bf16.msra.mxu0 0
        %689 = vmatprep.subr.bf16.mxu0 0
        %690 = vmatpush2.bf16.msra.mxu0 0
        %691 = vmatprep.subr.bf16.mxu0 0
        %692 = vmatpush2.bf16.msra.mxu0 0
        %693 = vmatprep.subr.bf16.mxu0 0
        %694 = vmatpush2.bf16.msra.mxu0 0
        %695 = vmatprep.subr.bf16.mxu0 0
        %696 = vmatpush2.bf16.msra.mxu0 0
        %697 = vmatprep.subr.bf16.mxu0 0
        %698 = vmatpush2.bf16.msra.mxu0 0
        %699 = vmatprep.subr.bf16.mxu0 0
        %700 = vmatpush2.bf16.msra.mxu0 0
        %701 = vmatprep.subr.bf16.mxu0 0
        %702 = vmatpush2.bf16.msra.mxu0 0
        %703 = vmatprep.mubr.bf16.mxu0 0
        %704 = vmatmul.mubr.bf16.gmra.mxu0 %v666
        %v705 = vpop.f32.mrf.mxu0
        %v706 = vadd.f32 0.0, %v705
        %v707 = vpop.f32.mrf.mxu0
        %v708 = vpop.f32.mrf.mxu0
        %v709 = vadd.f32 0.0, %v708
        %v710 = vpop.f32.mrf.mxu0
        %711 = vdwg.mxu0
        %v712 = vadd.f32 %v649, %v706
        %v713 = vadd.f32 %v650, %v709
        %s714 = scalar_lea.vmem %s1, 28
        %v715 = vld [vmem:[%s714] sm:$0xf]
        %v717 = vunpack.c.l.b16 %v657
        %v718 = vpack.c.b16 %v717, %v717
        %v719 = vshrl.u32 %v664, 16
        %v721 = vshll.u32 %v664, 16
        %v723 = vrot.slane %v721, 1
        %v724 = vor.u32 %v719, %v723
        %v726 = vshll.u32 %v718, 16
        %v728 = vrot.slane %v726, 1
        %v729 = vsel %vm306, %v724, %v728
        %v731 = vsel %vm319, %v729, 0
        %v734 = vsel %vm323, %v715, 0
        %736 = vmatprep.subr.bf16.mxu0 0
        %737 = vmatpush1.bf16.msra.mxu0 0
        %738 = vmatprep.subr.bf16.mxu0 0
        %739 = vmatpush1.bf16.msra.mxu0 0
        %740 = vmatprep.subr.bf16.mxu0 0
        %741 = vmatpush1.bf16.msra.mxu0 0
        %742 = vmatprep.subr.bf16.mxu0 0
        %743 = vmatpush1.bf16.msra.mxu0 0
        %744 = vmatprep.subr.bf16.mxu0 0
        %745 = vmatpush1.bf16.msra.mxu0 0
        %746 = vmatprep.subr.bf16.mxu0 0
        %747 = vmatpush1.bf16.msra.mxu0 0
        %748 = vmatprep.subr.bf16.mxu0 0
        %749 = vmatpush1.bf16.msra.mxu0 0
        %750 = vmatprep.subr.bf16.mxu0 0
        %751 = vmatpush1.bf16.msra.mxu0 %v734
        %752 = vmatprep.subr.bf16.mxu0 0
        %753 = vmatpush2.bf16.msra.mxu0 0
        %754 = vmatprep.subr.bf16.mxu0 0
        %755 = vmatpush2.bf16.msra.mxu0 0
        %756 = vmatprep.subr.bf16.mxu0 0
        %757 = vmatpush2.bf16.msra.mxu0 0
        %758 = vmatprep.subr.bf16.mxu0 0
        %759 = vmatpush2.bf16.msra.mxu0 0
        %760 = vmatprep.subr.bf16.mxu0 0
        %761 = vmatpush2.bf16.msra.mxu0 0
        %762 = vmatprep.subr.bf16.mxu0 0
        %763 = vmatpush2.bf16.msra.mxu0 0
        %764 = vmatprep.subr.bf16.mxu0 0
        %765 = vmatpush2.bf16.msra.mxu0 0
        %766 = vmatprep.subr.bf16.mxu0 0
        %767 = vmatpush2.bf16.msra.mxu0 0
        %768 = vmatprep.mubr.bf16.mxu0 0
        %769 = vmatmul.mubr.bf16.gmra.mxu0 %v731
        %v770 = vpop.f32.mrf.mxu0
        %v771 = vadd.f32 0.0, %v770
        %v772 = vpop.f32.mrf.mxu0
        %v773 = vpop.f32.mrf.mxu0
        %v774 = vadd.f32 0.0, %v773
        %v775 = vpop.f32.mrf.mxu0
        %776 = vdwg.mxu0
        %v777 = vadd.f32 %v712, %v771
        %v778 = vadd.f32 %v713, %v774
        %s779 = scalar_lea.vmem %s1, 32
        %v780 = vld [vmem:[%s779] sm:$0xf]
        %v781 = vrot.slane %v664, 1
        %v782 = vrot.slane %v718, 1
        %v783 = vsel %vm416, %v781, %v782
        %v785 = vsel %vm319, %v783, 0
        %v788 = vsel %vm323, %v780, 0
        %790 = vmatprep.subr.bf16.mxu0 0
        %791 = vmatpush1.bf16.msra.mxu0 0
        %792 = vmatprep.subr.bf16.mxu0 0
        %793 = vmatpush1.bf16.msra.mxu0 0
        %794 = vmatprep.subr.bf16.mxu0 0
        %795 = vmatpush1.bf16.msra.mxu0 0
        %796 = vmatprep.subr.bf16.mxu0 0
        %797 = vmatpush1.bf16.msra.mxu0 0
        %798 = vmatprep.subr.bf16.mxu0 0
        %799 = vmatpush1.bf16.msra.mxu0 0
        %800 = vmatprep.subr.bf16.mxu0 0
        %801 = vmatpush1.bf16.msra.mxu0 0
        %802 = vmatprep.subr.bf16.mxu0 0
        %803 = vmatpush1.bf16.msra.mxu0 0
        %804 = vmatprep.subr.bf16.mxu0 0
        %805 = vmatpush1.bf16.msra.mxu0 %v788
        %806 = vmatprep.subr.bf16.mxu0 0
        %807 = vmatpush2.bf16.msra.mxu0 0
        %808 = vmatprep.subr.bf16.mxu0 0
        %809 = vmatpush2.bf16.msra.mxu0 0
        %810 = vmatprep.subr.bf16.mxu0 0
        %811 = vmatpush2.bf16.msra.mxu0 0
        %812 = vmatprep.subr.bf16.mxu0 0
        %813 = vmatpush2.bf16.msra.mxu0 0
        %814 = vmatprep.subr.bf16.mxu0 0
        %815 = vmatpush2.bf16.msra.mxu0 0
        %816 = vmatprep.subr.bf16.mxu0 0
        %817 = vmatpush2.bf16.msra.mxu0 0
        %818 = vmatprep.subr.bf16.mxu0 0
        %819 = vmatpush2.bf16.msra.mxu0 0
        %820 = vmatprep.subr.bf16.mxu0 0
        %821 = vmatpush2.bf16.msra.mxu0 0
        %822 = vmatprep.mubr.bf16.mxu0 0
        %823 = vmatmul.mubr.bf16.gmra.mxu0 %v785
        %v824 = vpop.f32.mrf.mxu0
        %v825 = vadd.f32 0.0, %v824
        %v826 = vpop.f32.mrf.mxu0
        %v827 = vpop.f32.mrf.mxu0
        %v828 = vadd.f32 0.0, %v827
        %v829 = vpop.f32.mrf.mxu0
        %830 = vdwg.mxu0
        %v831 = vadd.f32 %v777, %v825
        %v832 = vadd.f32 %v778, %v828
        %v833 = vld [vmem:[#allocation2] sm:$0x1]
        %v834 = vsel %vm319, %v831, 0.0
        %v835 = vsel %vm319, %v832, 0.0
        %v836 = vadd.f32 %v834, %v835
        %v837 = vrot.slane %v836, 4
        %v838 = vadd.f32 %v836, %v837
        %v839 = vrot.slane %v838, 2
        %v840 = vadd.f32 %v838, %v839
        %v841 = vrot.slane %v840, 1
        %v842 = vadd.f32 %v840, %v841
        %v843 = vadd.f32 %v833, %v842
        %vm844 = vcmask 57344
        %845 = vst.msk [vmem:[#allocation2] sm:$0x1] %vm844, %v843
        %v846 = vld [vmem:[#allocation3] sm:$0x1]
        %v847 = vmul.f32 %v831, %v831
        %v848 = vmul.f32 %v832, %v832
        %v849 = vsel %vm319, %v847, 0.0
        %v850 = vsel %vm319, %v848, 0.0
        %v851 = vadd.f32 %v849, %v850
        %v852 = vrot.slane %v851, 4
        %v853 = vadd.f32 %v851, %v852
        %v854 = vrot.slane %v853, 2
        %v855 = vadd.f32 %v853, %v854
        %v856 = vrot.slane %v855, 1
        %v857 = vadd.f32 %v855, %v856
        %v858 = vadd.f32 %v846, %v857
        %859 = vst.msk [vmem:[#allocation3] sm:$0x1] %vm844, %v858
        %s860 = smul.u32 %s283, 16
        %s861 = scalar_lea.vmem %s270, %s860
        %862 = vst.msk [vmem:[%s861] sm:$0xff] %vm319, %v831
        %863 = vst.msk [vmem:[%s861 + $0x8] sm:$0xff] %vm319, %v832
      $region45: #{resnet_block_pallas.4} parent=35 // loop_footer
        %s287 = sadd.s32 1, %s283
      $region46: #{resnet_block_pallas.4} parent=35 // loop_footer_branch
        %282 = sbr.rel target = $region42
      $region47: #{resnet_block_pallas.4} parent=35 // loop_exit
        _
      %p864 = scmp.eq.s32.totalorder %s273, 1
      // Predicated region
      $region48: #{resnet_block_pallas.4} parent=35 // pred_check
        %p865 = pneg %p864
      $region49: #{resnet_block_pallas.4} parent=35 // pred_check_branch
        %867 = sbr.rel (%p865) target = $region51
      $region50: #{resnet_block_pallas.4} parent=35 // pred_region
        %v868 = vld [vmem:[#allocation2] sm:$0x1]
        %v869 = vrcp.pop 512.0
        %v870 = vmul.f32 %v868, %v869
        %v871 = vld [vmem:[#allocation3] sm:$0x1]
        %v872 = vmul.f32 %v871, %v869
        %v873 = vmul.f32 %v870, %v870
        %v874 = vsub.f32 %v872, %v873
        %v875 = vld [vmem:[%s2] sm:$0x1]
        %v876 = vadd.f32 %v874, 1e-05
        %v877 = vrsqrt.pop %v876
        %v878 = vmul.f32 %v875, %v877
        %vm879 = vcmask 57344
        %880 = vst.msk [vmem:[%s5] sm:$0x1] %vm879, %v878
        %v881 = vld [vmem:[%s3] sm:$0x1]
        %v882 = vmul.f32 %v870, %v878
        %v883 = vsub.f32 %v881, %v882
        %884 = vst.msk [vmem:[%s6] sm:$0x1] %vm879, %v883
      $region51: #{resnet_block_pallas.4} parent=35 // pred_fallthru
        _
      %s885 = smul.u32 16, %s23
      %p886 = scmp.lt.s32.totalorder %s22, 1
      %s887 = scalar_select %p886, %s22, 1
      %p888 = scmp.lt.s32.totalorder %s885, 15
      %s889 = scalar_select %p888, %s885, 15
      %s890 = smul.addr %s889, 2
      %s891 = smul.addr %s887, 32
      %s892 = sadd.s32 %s890, %s891
      %s893 = smul.addr %s892, 8
      %s894 = scalar_lea.vmem %s4, %s893
      // Predicated region
      $region52: #{resnet_block_pallas.4} parent=35 // pred_check
        %p895 = pneg %p139
      $region53: #{resnet_block_pallas.4} parent=35 // pred_check_branch
        %897 = sbr.rel (%p895) target = $region55
      $region54: #{resnet_block_pallas.4} parent=35 // pred_region
        %s898 = smul.u32 16, %s23
      $region55: #{resnet_block_pallas.4} parent=35 // pred_fallthru
        _
      // Predicated region
      $region56: #{resnet_block_pallas.4} parent=35 // pred_check
        %p899 = pneg %p160
      $region57: #{resnet_block_pallas.4} parent=35 // pred_check_branch
        %901 = sbr.rel (%p899) target = $region59
      $region58: #{resnet_block_pallas.4} parent=35 // pred_region
        _
      $region59: #{resnet_block_pallas.4} parent=35 // pred_fallthru
        _
      // Predicated region
      $region60: #{resnet_block_pallas.4} parent=35 // pred_check
        %p902 = pneg %p181
      $region61: #{resnet_block_pallas.4} parent=35 // pred_check_branch
        %904 = sbr.rel (%p902) target = $region63
      $region62: #{resnet_block_pallas.4} parent=35 // pred_region
        _
      $region63: #{resnet_block_pallas.4} parent=35 // pred_fallthru
        _
      // Predicated region
      $region64: #{resnet_block_pallas.4} parent=35 // pred_check
        %p905 = pneg %p160
      $region65: #{resnet_block_pallas.4} parent=35 // pred_check_branch
        %907 = sbr.rel (%p905) target = $region67
      $region66: #{resnet_block_pallas.4} parent=35 // pred_region
        _
      $region67: #{resnet_block_pallas.4} parent=35 // pred_fallthru
        _
      // Predicated region
      $region68: #{resnet_block_pallas.4} parent=35 // pred_check
        %p908 = pneg %p181
      $region69: #{resnet_block_pallas.4} parent=35 // pred_check_branch
        %910 = sbr.rel (%p908) target = $region71
      $region70: #{resnet_block_pallas.4} parent=35 // pred_region
        _
      $region71: #{resnet_block_pallas.4} parent=35 // pred_fallthru
        _
    $region36: #{resnet_block_pallas.4} parent=5 // pred_fallthru
      _
    %p911 = scmp.le.s32.totalorder 2, %s13
    // Predicated region
    $region72: #{resnet_block_pallas.4} parent=5 // pred_check
      %p912 = pneg %p911
    $region73: #{resnet_block_pallas.4} parent=5 // pred_check_branch
      %914 = sbr.rel (%p912) target = $region75
    $region74: #{resnet_block_pallas.4} parent=5 // pred_region
      %s915 = ssub.s32 %s13, 2
      // Predicated region
      $region76: #{resnet_block_pallas.4} parent=74 // pred_check
        %p916 = pneg %p145
      $region77: #{resnet_block_pallas.4} parent=74 // pred_check_branch
        %918 = sbr.rel (%p916) target = $region79
      $region78: #{resnet_block_pallas.4} parent=74 // pred_region
        %s919 = smul.u32 16, %s25
        %p920 = scmp.lt.s32.totalorder %s24, 1
        %s921 = scalar_select %p920, %s24, 1
        %p922 = scmp.lt.s32.totalorder %s919, 15
        %s923 = scalar_select %p922, %s919, 15
        %s924 = smul.addr %s923, 2
        %s925 = smul.addr %s921, 32
        %s926 = sadd.s32 %s924, %s925
        %s927 = smul.addr %s926, 8
        %s928 = scalar_lea.vmem %s4, %s927
      $region79: #{resnet_block_pallas.4} parent=74 // pred_fallthru
        _
    $region75: #{resnet_block_pallas.4} parent=5 // pred_fallthru
      _
  $region6: #{resnet_block_pallas.4} parent=0 // loop_footer
    %s17 = sadd.s32 1, %s13
  $region7: #{resnet_block_pallas.4} parent=0 // loop_footer_branch
    %12 = sbr.rel target = $region3
  $region8: #{resnet_block_pallas.4} parent=0 // loop_exit
    _

</llo_original>
